<compile_context>
chip_gen: v5e
topology: v5e:2x2
jax: 0.10.0
libtpu: 0.0.40
codegen_flags: <defaults>
</compile_context>

<pallas_src>
import functools

import jax
import jax.numpy as jnp
from jax.experimental import pallas as pl
from jax.experimental.pallas import tpu as pltpu

# Synthetic sizes for the two opaque helpers in the original code.
FEATURE_SIZE = 384   # get_feature_vector_size()
MOVE_SPACE   = 512   # get_move_space_size()
HIDDEN1 = 512
HIDDEN2 = 256
VALUE_PAD = 128                      # value column padded to a full lane group
HEAD_OUT = MOVE_SPACE + VALUE_PAD    # fused policy+value head width (640)


def _round_up(n, m):
    return ((n + m - 1) // m) * m


def _pick_tb(B):
    """Batch-tile selection.

    Large batches: 512-1024 rows per tile with >= 2 grid steps (keeps both v7x
    TensorCores busy, amortizes per-step pipeline overhead).
    Tiny batches: pad only to a multiple of 16 (bf16 sublane packing) -> single
    small tile, minimal wasted work.
    """
    for tb in (1024, 512, 256, 128):
        if B >= 2 * tb:
            return tb
    if B > 128:
        return 128
    return max(16, _round_up(B, 16))


def _weight_bytes():
    return (FEATURE_SIZE * HIDDEN1 * 2 + HIDDEN1 * 4 +
            HIDDEN1 * HIDDEN2 * 2 + HIDDEN2 * 4 +
            HIDDEN2 * HEAD_OUT * 2 + HEAD_OUT * 4)


def giraffe_kernel(x_ref, w1_ref, b1_ref, w2_ref, b2_ref, wh_ref, bh_ref, out_ref):
    # fc1 + relu (bf16 matmul operands, f32 accumulate / epilogue)
    h1 = jnp.dot(x_ref[...], w1_ref[...], preferred_element_type=jnp.float32)
    h1 = jnp.maximum(h1 + b1_ref[...], 0.0)

    # fc2 + relu
    h2 = jnp.dot(h1.astype(jnp.bfloat16), w2_ref[...],
                 preferred_element_type=jnp.float32)
    h2 = jnp.maximum(h2 + b2_ref[...], 0.0)

    # fused policy+value head: one lane-dense (HIDDEN2, 640) matmul
    logits = jnp.dot(h2.astype(jnp.bfloat16), wh_ref[...],
                     preferred_element_type=jnp.float32)
    logits = logits + bh_ref[...]

    # softmax over the policy columns (torch softmax(dim=1)), f32 math
    pol = logits[:, :MOVE_SPACE]
    m = jnp.max(pol, axis=-1, keepdims=True)
    e = jnp.exp(pol - m)
    denom = jnp.sum(e, axis=-1, keepdims=True)
    inv = pl.reciprocal(denom, approx=True)        # EUP slot, off the VALU
    inv = inv * (2.0 - denom * inv)                # one Newton step -> ~f32 accuracy
    out_ref[:, :MOVE_SPACE] = (e * inv).astype(out_ref.dtype)

    # value head + tanh (value lives in column MOVE_SPACE of the padded slab)
    out_ref[:, MOVE_SPACE:] = jnp.tanh(logits[:, MOVE_SPACE:]).astype(out_ref.dtype)


def prepare_params(params):
    """Fuse the value head into the policy head and cast matmul weights to bf16."""
    wp, bp = params["wp"], params["bp"]            # (256, 512), (1, 512)
    wv, bv = params["wv"], params["bv"]            # (256, 1),   (1, 1)
    wh = jnp.concatenate(
        [wp, jnp.pad(wv, ((0, 0), (0, VALUE_PAD - 1)))], axis=1)   # (256, 640)
    bh = jnp.concatenate(
        [bp, jnp.pad(bv, ((0, 0), (0, VALUE_PAD - 1)))], axis=1)   # (1, 640)
    return dict(
        w1=params["w1"].astype(jnp.bfloat16),
        b1=params["b1"].astype(jnp.float32),
        w2=params["w2"].astype(jnp.bfloat16),
        b2=params["b2"].astype(jnp.float32),
        wh=wh.astype(jnp.bfloat16),
        bh=bh.astype(jnp.float32),
    )


@functools.partial(jax.jit, static_argnames=("tb", "out_dtype"))
def _giraffe_forward_tiled(x, kp, tb, out_dtype):
    B = x.shape[0]
    Bp = _round_up(B, tb)
    if Bp != B:
        x = jnp.pad(x, ((0, Bp - B), (0, 0)))
    x = x.astype(jnp.bfloat16)

    out_bpe = jnp.dtype(out_dtype).itemsize
    wbytes = _weight_bytes()

    # Double-buffered x/out tiles + (conservatively double-buffered) resident
    # weights + headroom; matters on v5e's 16 MiB scoped-VMEM default.
    vmem_need = 2 * (tb * FEATURE_SIZE * 2 + tb * HEAD_OUT * out_bpe) + 2 * wbytes + (4 << 20)
    vmem_limit = int(min(max(vmem_need, 16 << 20), 64 << 20))

    flops = 2 * Bp * (FEATURE_SIZE * HIDDEN1 + HIDDEN1 * HIDDEN2 + HIDDEN2 * HEAD_OUT)
    transcendentals = Bp * (MOVE_SPACE + 2)            # exp per policy col + tanh + recip
    bytes_accessed = Bp * FEATURE_SIZE * 2 + Bp * HEAD_OUT * out_bpe + wbytes

    out = pl.pallas_call(
        giraffe_kernel,
        out_shape=jax.ShapeDtypeStruct((Bp, HEAD_OUT), out_dtype),
        grid_spec=pltpu.PrefetchScalarGridSpec(
            num_scalar_prefetch=0,
            grid=(Bp // tb,),
            in_specs=[
                pl.BlockSpec((tb, FEATURE_SIZE), lambda i: (i, 0)),       # x tile
                pl.BlockSpec((FEATURE_SIZE, HIDDEN1), lambda i: (0, 0)),  # w1 (resident)
                pl.BlockSpec((1, HIDDEN1), lambda i: (0, 0)),             # b1
                pl.BlockSpec((HIDDEN1, HIDDEN2), lambda i: (0, 0)),       # w2 (resident)
                pl.BlockSpec((1, HIDDEN2), lambda i: (0, 0)),             # b2
                pl.BlockSpec((HIDDEN2, HEAD_OUT), lambda i: (0, 0)),      # fused head W
                pl.BlockSpec((1, HEAD_OUT), lambda i: (0, 0)),            # fused head b
            ],
            out_specs=pl.BlockSpec((tb, HEAD_OUT), lambda i: (i, 0)),
        ),
        compiler_params=pltpu.CompilerParams(
            dimension_semantics=("parallel",),         # shard batch tiles across TCs (v7x)
            vmem_limit_bytes=vmem_limit,
        ),
        cost_estimate=pl.CostEstimate(
            flops=flops,
            transcendentals=transcendentals,
            bytes_accessed=bytes_accessed,
        ),
    )(x, kp["w1"], kp["b1"], kp["w2"], kp["b2"], kp["wh"], kp["bh"])

    policy = out[:B, :MOVE_SPACE]
    value = out[:B, MOVE_SPACE:MOVE_SPACE + 1]
    return policy, value


def giraffe_forward(x, kp, out_dtype=jnp.bfloat16):
    """x: (B, FEATURE_SIZE) f32. Returns (policy (B, MOVE_SPACE), value (B, 1))."""
    tb = _pick_tb(x.shape[0])
    return _giraffe_forward_tiled(x, kp, tb, out_dtype)


def init_params(key):
    """Deterministic synthetic f32 parameters; weights stored as (in, out)."""
    ks = jax.random.split(key, 8)

    def lin(kw, kb, fan_in, fan_out):
        # Kaiming-uniform-ish bound like torch.nn.Linear default init.
        bound = 1.0 / jnp.sqrt(fan_in)
        w = jax.random.uniform(kw, (fan_in, fan_out), jnp.float32, -bound, bound)
        b = jax.random.uniform(kb, (1, fan_out), jnp.float32, -bound, bound)
        return w, b

    w1, b1 = lin(ks[0], ks[1], FEATURE_SIZE, HIDDEN1)
    w2, b2 = lin(ks[2], ks[3], HIDDEN1, HIDDEN2)
    wp, bp = lin(ks[4], ks[5], HIDDEN2, MOVE_SPACE)
    wv, bv = lin(ks[6], ks[7], HIDDEN2, 1)
    return dict(w1=w1, b1=b1, w2=w2, b2=b2, wp=wp, bp=bp, wv=wv, bv=bv)


def reference_forward(x, p):
    """Plain-JAX reference with the same bf16-operand / f32-accumulate matmuls."""
    bf = jnp.bfloat16

    def mm(a, w):
        return jnp.dot(a.astype(bf), w.astype(bf), preferred_element_type=jnp.float32)

    h1 = jnp.maximum(mm(x, p["w1"]) + p["b1"], 0.0)
    h2 = jnp.maximum(mm(h1, p["w2"]) + p["b2"], 0.0)
    policy = jax.nn.softmax(mm(h2, p["wp"]) + p["bp"], axis=1)
    value = jnp.tanh(mm(h2, p["wv"]) + p["bv"])
    return policy, value


def _check(x, params, kernel_params, atol):
    policy, value = giraffe_forward(x, kernel_params)
    jax.block_until_ready((policy, value))
    ref_policy, ref_value = reference_forward(x, params)
    B = x.shape[0]
    assert policy.shape == (B, MOVE_SPACE) and value.shape == (B, 1)
    # bf16 output slab -> loosened tolerances (~2^-9 relative rounding).
    assert jnp.allclose(policy.astype(jnp.float32), ref_policy, atol=atol, rtol=2e-2)
    assert jnp.allclose(value.astype(jnp.float32), ref_value, atol=atol, rtol=2e-2)
    assert jnp.allclose(jnp.sum(policy.astype(jnp.float32), axis=1), 1.0, atol=atol)


if __name__ == "__main__":
    key = jax.random.PRNGKey(0)
    kx, kparam, kx2 = jax.random.split(key, 3)

    params = init_params(kparam)
    kernel_params = prepare_params(params)

    # Tiny-batch path (B=2 demo): single 16-row tile.
    B = 2
    x = jax.random.normal(kx, (B, FEATURE_SIZE), jnp.float32)
    _check(x, params, kernel_params, atol=5e-3)

    # Multi-tile path spot-check (grid of 2 steps, exercises the "parallel" axis).
    x_big = jax.random.normal(kx2, (256, FEATURE_SIZE), jnp.float32)
    _check(x_big, params, kernel_params, atol=5e-3)

    print("KERNEL_OK")
</pallas_src>

<mosaic_0001>
module attributes {stable_mosaic.version = 11 : i64} {
  func.func @giraffe_kernel(%arg0: i32, %arg1: memref<16x384xbf16, #tpu.memory_space<vmem>>, %arg2: memref<384x512xbf16, #tpu.memory_space<vmem>>, %arg3: memref<1x512xf32, #tpu.memory_space<vmem>>, %arg4: memref<512x256xbf16, #tpu.memory_space<vmem>>, %arg5: memref<1x256xf32, #tpu.memory_space<vmem>>, %arg6: memref<256x640xbf16, #tpu.memory_space<vmem>>, %arg7: memref<1x640xf32, #tpu.memory_space<vmem>>, %arg8: memref<16x640xbf16, #tpu.memory_space<vmem>>) attributes {dimension_semantics = [#tpu.dimension_semantics<parallel>], iteration_bounds = array<i64: 1>, scalar_prefetch = 0 : i64, scratch_operands = 0 : i64, tpu.core_type = #tpu.core_type<tc>, window_params = [{transform_indices = @transform_0, window_bounds = array<i64: 16, 384>}, {pipeline_mode = #tpu.pipeline_mode<synchronous>, transform_indices = @transform_1, window_bounds = array<i64: 384, 512>}, {pipeline_mode = #tpu.pipeline_mode<synchronous>, transform_indices = @transform_2, window_bounds = array<i64: 1, 512>}, {pipeline_mode = #tpu.pipeline_mode<synchronous>, transform_indices = @transform_3, window_bounds = array<i64: 512, 256>}, {pipeline_mode = #tpu.pipeline_mode<synchronous>, transform_indices = @transform_4, window_bounds = array<i64: 1, 256>}, {pipeline_mode = #tpu.pipeline_mode<synchronous>, transform_indices = @transform_5, window_bounds = array<i64: 256, 640>}, {pipeline_mode = #tpu.pipeline_mode<synchronous>, transform_indices = @transform_6, window_bounds = array<i64: 1, 640>}, {transform_indices = @transform_7, window_bounds = array<i64: 16, 640>}]} {
    %c0 = arith.constant 0 : index
    %c0_0 = arith.constant 0 : index
    %0 = vector.load %arg1[%c0, %c0_0] : memref<16x384xbf16, #tpu.memory_space<vmem>>, vector<16x384xbf16>
    %c0_1 = arith.constant 0 : index
    %c0_2 = arith.constant 0 : index
    %1 = vector.load %arg2[%c0_1, %c0_2] : memref<384x512xbf16, #tpu.memory_space<vmem>>, vector<384x512xbf16>
    %cst = arith.constant dense<0.000000e+00> : vector<16x512xf32>
    %2 = tpu.matmul %0, %1, %cst {dimension_numbers = #tpu.dot_dimension_numbers<[1], [0], [0], [1], [0, 0, 1, 1], [], []>} : vector<16x384xbf16>, vector<384x512xbf16>, vector<16x512xf32> -> vector<16x512xf32>
    %c0_3 = arith.constant 0 : index
    %c0_4 = arith.constant 0 : index
    %3 = vector.load %arg3[%c0_3, %c0_4] : memref<1x512xf32, #tpu.memory_space<vmem>>, vector<1x512xf32>
    %4 = vector.broadcast %3 : vector<1x512xf32> to vector<16x512xf32>
    %5 = arith.addf %2, %4 : vector<16x512xf32>
    %cst_5 = arith.constant 0.000000e+00 : f32
    %6 = vector.broadcast %cst_5 : f32 to vector<16x512xf32>
    %7 = arith.maximumf %5, %6 : vector<16x512xf32>
    %8 = arith.truncf %7 : vector<16x512xf32> to vector<16x512xbf16>
    %c0_6 = arith.constant 0 : index
    %c0_7 = arith.constant 0 : index
    %9 = vector.load %arg4[%c0_6, %c0_7] : memref<512x256xbf16, #tpu.memory_space<vmem>>, vector<512x256xbf16>
    %cst_8 = arith.constant dense<0.000000e+00> : vector<16x256xf32>
    %10 = tpu.matmul %8, %9, %cst_8 {dimension_numbers = #tpu.dot_dimension_numbers<[1], [0], [0], [1], [0, 0, 1, 1], [], []>} : vector<16x512xbf16>, vector<512x256xbf16>, vector<16x256xf32> -> vector<16x256xf32>
    %c0_9 = arith.constant 0 : index
    %c0_10 = arith.constant 0 : index
    %11 = vector.load %arg5[%c0_9, %c0_10] : memref<1x256xf32, #tpu.memory_space<vmem>>, vector<1x256xf32>
    %12 = vector.broadcast %11 : vector<1x256xf32> to vector<16x256xf32>
    %13 = arith.addf %10, %12 : vector<16x256xf32>
    %cst_11 = arith.constant 0.000000e+00 : f32
    %14 = vector.broadcast %cst_11 : f32 to vector<16x256xf32>
    %15 = arith.maximumf %13, %14 : vector<16x256xf32>
    %16 = arith.truncf %15 : vector<16x256xf32> to vector<16x256xbf16>
    %c0_12 = arith.constant 0 : index
    %c0_13 = arith.constant 0 : index
    %17 = vector.load %arg6[%c0_12, %c0_13] : memref<256x640xbf16, #tpu.memory_space<vmem>>, vector<256x640xbf16>
    %cst_14 = arith.constant dense<0.000000e+00> : vector<16x640xf32>
    %18 = tpu.matmul %16, %17, %cst_14 {dimension_numbers = #tpu.dot_dimension_numbers<[1], [0], [0], [1], [0, 0, 1, 1], [], []>} : vector<16x256xbf16>, vector<256x640xbf16>, vector<16x640xf32> -> vector<16x640xf32>
    %c0_15 = arith.constant 0 : index
    %c0_16 = arith.constant 0 : index
    %19 = vector.load %arg7[%c0_15, %c0_16] : memref<1x640xf32, #tpu.memory_space<vmem>>, vector<1x640xf32>
    %20 = vector.broadcast %19 : vector<1x640xf32> to vector<16x640xf32>
    %21 = arith.addf %18, %20 : vector<16x640xf32>
    %22 = vector.extract_strided_slice %21 {offsets = [0, 0], sizes = [16, 512], strides = [1, 1]} : vector<16x640xf32> to vector<16x512xf32>
    %cst_17 = arith.constant dense<0xFF800000> : vector<16xf32>
    %23 = vector.multi_reduction <maximumf>, %22, %cst_17 [1] : vector<16x512xf32> to vector<16xf32>
    %24 = vector.shape_cast %23 : vector<16xf32> to vector<16x1xf32>
    %25 = vector.broadcast %24 : vector<16x1xf32> to vector<16x512xf32>
    %26 = arith.subf %22, %25 : vector<16x512xf32>
    %27 = math.exp %26 : vector<16x512xf32>
    %cst_18 = arith.constant dense<0.000000e+00> : vector<16xf32>
    %28 = vector.multi_reduction <add>, %27, %cst_18 [1] : vector<16x512xf32> to vector<16xf32>
    %29 = vector.shape_cast %28 : vector<16xf32> to vector<16x1xf32>
    %30 = tpu.reciprocal %29 {approx = true} : vector<16x1xf32> -> vector<16x1xf32>
    %31 = arith.mulf %29, %30 : vector<16x1xf32>
    %cst_19 = arith.constant 2.000000e+00 : f32
    %32 = vector.broadcast %cst_19 : f32 to vector<16x1xf32>
    %33 = arith.subf %32, %31 : vector<16x1xf32>
    %34 = arith.mulf %30, %33 : vector<16x1xf32>
    %35 = vector.broadcast %34 : vector<16x1xf32> to vector<16x512xf32>
    %36 = arith.mulf %27, %35 : vector<16x512xf32>
    %37 = arith.truncf %36 : vector<16x512xf32> to vector<16x512xbf16>
    %c0_20 = arith.constant 0 : index
    %c0_21 = arith.constant 0 : index
    %38 = vector.load %arg8[%c0_20, %c0_21] : memref<16x640xbf16, #tpu.memory_space<vmem>>, vector<16x512xbf16>
    tpu.vector_store %arg8[%c0_20, %c0_21], %37 {strides = array<i32>} : memref<16x640xbf16, #tpu.memory_space<vmem>>, vector<16x512xbf16>,
    %39 = vector.extract_strided_slice %21 {offsets = [0, 512], sizes = [16, 128], strides = [1, 1]} : vector<16x640xf32> to vector<16x128xf32>
    %40 = math.tanh %39 : vector<16x128xf32>
    %41 = arith.truncf %40 : vector<16x128xf32> to vector<16x128xbf16>
    %c0_22 = arith.constant 0 : index
    %c512 = arith.constant 512 : index
    %42 = vector.load %arg8[%c0_22, %c512] : memref<16x640xbf16, #tpu.memory_space<vmem>>, vector<16x128xbf16>
    tpu.vector_store %arg8[%c0_22, %c512], %41 {strides = array<i32>} : memref<16x640xbf16, #tpu.memory_space<vmem>>, vector<16x128xbf16>,
    return
  }
  func.func @transform_0(%arg0: i32) -> (i32, i32) {
    %c0_i32 = arith.constant 0 : i32
    %c0_i32_0 = arith.constant 0 : i32
    return %arg0, %c0_i32 : i32, i32
  }
  func.func @transform_1(%arg0: i32) -> (i32, i32) {
    %c0_i32 = arith.constant 0 : i32
    %c0_i32_0 = arith.constant 0 : i32
    %c0_i32_1 = arith.constant 0 : i32
    return %c0_i32, %c0_i32_0 : i32, i32
  }
  func.func @transform_2(%arg0: i32) -> (i32, i32) {
    %c0_i32 = arith.constant 0 : i32
    %c0_i32_0 = arith.constant 0 : i32
    %c0_i32_1 = arith.constant 0 : i32
    return %c0_i32, %c0_i32_0 : i32, i32
  }
  func.func @transform_3(%arg0: i32) -> (i32, i32) {
    %c0_i32 = arith.constant 0 : i32
    %c0_i32_0 = arith.constant 0 : i32
    %c0_i32_1 = arith.constant 0 : i32
    return %c0_i32, %c0_i32_0 : i32, i32
  }
  func.func @transform_4(%arg0: i32) -> (i32, i32) {
    %c0_i32 = arith.constant 0 : i32
    %c0_i32_0 = arith.constant 0 : i32
    %c0_i32_1 = arith.constant 0 : i32
    return %c0_i32, %c0_i32_0 : i32, i32
  }
  func.func @transform_5(%arg0: i32) -> (i32, i32) {
    %c0_i32 = arith.constant 0 : i32
    %c0_i32_0 = arith.constant 0 : i32
    %c0_i32_1 = arith.constant 0 : i32
    return %c0_i32, %c0_i32_0 : i32, i32
  }
  func.func @transform_6(%arg0: i32) -> (i32, i32) {
    %c0_i32 = arith.constant 0 : i32
    %c0_i32_0 = arith.constant 0 : i32
    %c0_i32_1 = arith.constant 0 : i32
    return %c0_i32, %c0_i32_0 : i32, i32
  }
  func.func @transform_7(%arg0: i32) -> (i32, i32) {
    %c0_i32 = arith.constant 0 : i32
    %c0_i32_0 = arith.constant 0 : i32
    return %arg0, %c0_i32 : i32, i32
  }
}

</mosaic_0001>

<llo_original>
// kernel: _giraffe_forward_tiled.1
$region0: #{_giraffe_forward_tiled.1}
  #allocation0 [shape = 'u32[]', space=smem, size = 0x4, offset = 0x4, fixed_abs, tag = 'smem constant byte address 0x4 - core index']
  #allocation1 [shape = 'u32[72,128]{1,0:T(1,128)}', space=vmem, size = 0x9000, scoped, tag = 'internal scratch']
  %s0 = inlined_call_operand.vmem [shape: bf16[16,384], index: 0, kind: input, shape index: {}]
  %s1 = inlined_call_operand.hbm [shape: bf16[384,512], index: 1, kind: input, shape index: {}]
  %s2 = inlined_call_operand.vmem [shape: f32[1,512], index: 2, kind: input, shape index: {}]
  %s3 = inlined_call_operand.hbm [shape: bf16[512,256], index: 3, kind: input, shape index: {}]
  %s4 = inlined_call_operand.vmem [shape: f32[1,256], index: 4, kind: input, shape index: {}]
  %s5 = inlined_call_operand.hbm [shape: bf16[256,640], index: 5, kind: input, shape index: {}]
  %s6 = inlined_call_operand.vmem [shape: f32[1,640], index: 6, kind: input, shape index: {}]
  %s7 = inlined_call_operand.vmem [shape: bf16[16,640], index: 7, kind: output, shape index: {}]
  %s8 = sld [smem:[#allocation0]]
  $region50: #{_giraffe_forward_tiled.1} parent=0
    _
  %s10 = ssub.s32 1, %s8
  %s11 = scalar_select 0, %s10, %s8
  $region1: #{_giraffe_forward_tiled.1} parent=0
    #allocation2 [shape = 'u8[393216]{0}', space=vmem, size = 0x60000, scoped, tag = 'input window, operand 1, single buffered']
    #allocation3 [shape = 's32[1]{0}', space=sflag, size = 0x4, scoped, tag = 'scoped memory for _giraffe_forward_tiled.1']
    #allocation4 [shape = 'u8[262144]{0}', space=vmem, size = 0x40000, scoped, tag = 'input window, operand 3, single buffered']
    #allocation5 [shape = 's32[1]{0}', space=sflag, size = 0x4, scoped, tag = 'scoped memory for _giraffe_forward_tiled.1']
    #allocation6 [shape = 'u8[327680]{0}', space=vmem, size = 0x50000, scoped, tag = 'input window, operand 5, single buffered']
    %12 = vsyncpa [#allocation3], 0
    %13 = vsyncpa [#allocation5], 0
    // Predicated region
    $region2: #{_giraffe_forward_tiled.1} parent=1 // pred_check
      _
    $region3: #{_giraffe_forward_tiled.1} parent=1 // pred_check_branch
      %15 = sbr.rel (0) target = $region5
    $region4: #{_giraffe_forward_tiled.1} parent=1 // pred_region
      _
    $region5: #{_giraffe_forward_tiled.1} parent=1 // pred_fallthru
      _
    // Predicated region
    $region6: #{_giraffe_forward_tiled.1} parent=1 // pred_check
      _
    $region7: #{_giraffe_forward_tiled.1} parent=1 // pred_check_branch
      %17 = sbr.rel (0) target = $region9
    $region8: #{_giraffe_forward_tiled.1} parent=1 // pred_region
      %19 = vsyncadd [#allocation3], 0
      %s20 = sshll.u32 %s1, 4
      %s21 = int_to_ptr.hbm [resolvable:$true] %s20
      %s22 = sshll.u32 [#allocation2], 4
      %s23 = int_to_ptr.vmem [resolvable:$true] %s22
      %28 = dma.hbm_to_vmem [thread:$0]  %s21, 12288, %s23, [#allocation3], 256, 256, 16
    $region9: #{_giraffe_forward_tiled.1} parent=1 // pred_fallthru
      _
    // Predicated region
    $region10: #{_giraffe_forward_tiled.1} parent=1 // pred_check
      _
    $region11: #{_giraffe_forward_tiled.1} parent=1 // pred_check_branch
      %30 = sbr.rel (0) target = $region13
    $region12: #{_giraffe_forward_tiled.1} parent=1 // pred_region
      _
    $region13: #{_giraffe_forward_tiled.1} parent=1 // pred_fallthru
      _
    // Predicated region
    $region14: #{_giraffe_forward_tiled.1} parent=1 // pred_check
      _
    $region15: #{_giraffe_forward_tiled.1} parent=1 // pred_check_branch
      %32 = sbr.rel (0) target = $region17
    $region16: #{_giraffe_forward_tiled.1} parent=1 // pred_region
      %34 = vsyncadd [#allocation5], 0
      %s35 = sshll.u32 %s3, 4
      %s36 = int_to_ptr.hbm [resolvable:$true] %s35
      %s37 = sshll.u32 [#allocation4], 4
      %s38 = int_to_ptr.vmem [resolvable:$true] %s37
      %43 = dma.hbm_to_vmem [thread:$0]  %s36, 8192, %s38, [#allocation5], 128, 128, 8
    $region17: #{_giraffe_forward_tiled.1} parent=1 // pred_fallthru
      _
    // Predicated region
    $region18: #{_giraffe_forward_tiled.1} parent=1 // pred_check
      _
    $region19: #{_giraffe_forward_tiled.1} parent=1 // pred_check_branch
      %45 = sbr.rel (0) target = $region21
    $region20: #{_giraffe_forward_tiled.1} parent=1 // pred_region
      _
    $region21: #{_giraffe_forward_tiled.1} parent=1 // pred_fallthru
      _
    // Predicated region
    $region22: #{_giraffe_forward_tiled.1} parent=1 // pred_check
      _
    $region23: #{_giraffe_forward_tiled.1} parent=1 // pred_check_branch
      %47 = sbr.rel (0) target = $region25
    $region24: #{_giraffe_forward_tiled.1} parent=1 // pred_region
      %49 = vsyncadd [#allocation5], 0
      %s50 = sshll.u32 %s5, 4
      %s51 = int_to_ptr.hbm [resolvable:$true] %s50
      %s52 = sshll.u32 [#allocation6], 4
      %s53 = int_to_ptr.vmem [resolvable:$true] %s52
      %58 = dma.hbm_to_vmem [thread:$0]  %s51, 10240, %s53, [#allocation5], 320, 320, 20
    $region25: #{_giraffe_forward_tiled.1} parent=1 // pred_fallthru
      _
    // Predicated region
    $region26: #{_giraffe_forward_tiled.1} parent=1 // pred_check
      _
    $region27: #{_giraffe_forward_tiled.1} parent=1 // pred_check_branch
      %60 = sbr.rel (0) target = $region29
    $region28: #{_giraffe_forward_tiled.1} parent=1 // pred_region
      _
    $region29: #{_giraffe_forward_tiled.1} parent=1 // pred_fallthru
      _
    // Predicated region
    $region30: #{_giraffe_forward_tiled.1} parent=1 // pred_check
      _
    $region31: #{_giraffe_forward_tiled.1} parent=1 // pred_check_branch
      %62 = sbr.rel (0) target = $region33
    $region32: #{_giraffe_forward_tiled.1} parent=1 // pred_region
      %64 = dma.done [#allocation3], 12288
    $region33: #{_giraffe_forward_tiled.1} parent=1 // pred_fallthru
      _
    // Predicated region
    $region34: #{_giraffe_forward_tiled.1} parent=1 // pred_check
      _
    $region35: #{_giraffe_forward_tiled.1} parent=1 // pred_check_branch
      %66 = sbr.rel (0) target = $region37
    $region36: #{_giraffe_forward_tiled.1} parent=1 // pred_region
      %68 = dma.done [#allocation5], 8192
    $region37: #{_giraffe_forward_tiled.1} parent=1 // pred_fallthru
      _
    // Predicated region
    $region38: #{_giraffe_forward_tiled.1} parent=1 // pred_check
      _
    $region39: #{_giraffe_forward_tiled.1} parent=1 // pred_check_branch
      %70 = sbr.rel (0) target = $region41
    $region40: #{_giraffe_forward_tiled.1} parent=1 // pred_region
      %72 = dma.done [#allocation5], 10240
    $region41: #{_giraffe_forward_tiled.1} parent=1 // pred_fallthru
      _
    %v73 = vld [vmem:[%s0] sm:$0xff]
    %v74 = vld [vmem:[%s0 + $0x8] sm:$0xf]
    %v75 = vld [vmem:[%s0 + $0xc] sm:$0xff]
    %v76 = vld [vmem:[%s0 + $0x14] sm:$0xf]
    %v77 = vld [vmem:[#allocation2] sm:$0xff]
    %v78 = vld [vmem:[#allocation2 + $0x8] sm:$0xff]
    %v79 = vld [vmem:[#allocation2 + $0x10] sm:$0xff]
    %v80 = vld [vmem:[#allocation2 + $0x18] sm:$0xff]
    %v81 = vld [vmem:[#allocation2 + $0x20] sm:$0xff]
    %v82 = vld [vmem:[#allocation2 + $0x28] sm:$0xff]
    %v83 = vld [vmem:[#allocation2 + $0x30] sm:$0xff]
    %v84 = vld [vmem:[#allocation2 + $0x38] sm:$0xff]
    %v85 = vld [vmem:[#allocation2 + $0x40] sm:$0xff]
    %v86 = vld [vmem:[#allocation2 + $0x48] sm:$0xff]
    %v87 = vld [vmem:[#allocation2 + $0x50] sm:$0xff]
    %v88 = vld [vmem:[#allocation2 + $0x58] sm:$0xff]
    %v89 = vld [vmem:[#allocation2 + $0x60] sm:$0xff]
    %v90 = vld [vmem:[#allocation2 + $0x68] sm:$0xff]
    %v91 = vld [vmem:[#allocation2 + $0x70] sm:$0xff]
    %v92 = vld [vmem:[#allocation2 + $0x78] sm:$0xff]
    %v93 = vld [vmem:[#allocation2 + $0x80] sm:$0xff]
    %v94 = vld [vmem:[#allocation2 + $0x88] sm:$0xff]
    %v95 = vld [vmem:[#allocation2 + $0x90] sm:$0xff]
    %v96 = vld [vmem:[#allocation2 + $0x98] sm:$0xff]
    %v97 = vld [vmem:[#allocation2 + $0xa0] sm:$0xff]
    %v98 = vld [vmem:[#allocation2 + $0xa8] sm:$0xff]
    %v99 = vld [vmem:[#allocation2 + $0xb0] sm:$0xff]
    %v100 = vld [vmem:[#allocation2 + $0xb8] sm:$0xff]
    %v101 = vld [vmem:[#allocation2 + $0xc0] sm:$0xff]
    %v102 = vld [vmem:[#allocation2 + $0xc8] sm:$0xff]
    %v103 = vld [vmem:[#allocation2 + $0xd0] sm:$0xff]
    %v104 = vld [vmem:[#allocation2 + $0xd8] sm:$0xff]
    %v105 = vld [vmem:[#allocation2 + $0xe0] sm:$0xff]
    %v106 = vld [vmem:[#allocation2 + $0xe8] sm:$0xff]
    %v107 = vld [vmem:[#allocation2 + $0xf0] sm:$0xff]
    %v108 = vld [vmem:[#allocation2 + $0xf8] sm:$0xff]
    %v109 = vld [vmem:[#allocation2 + $0x100] sm:$0xff]
    %v110 = vld [vmem:[#allocation2 + $0x108] sm:$0xff]
    %v111 = vld [vmem:[#allocation2 + $0x110] sm:$0xff]
    %v112 = vld [vmem:[#allocation2 + $0x118] sm:$0xff]
    %v113 = vld [vmem:[#allocation2 + $0x120] sm:$0xff]
    %v114 = vld [vmem:[#allocation2 + $0x128] sm:$0xff]
    %v115 = vld [vmem:[#allocation2 + $0x130] sm:$0xff]
    %v116 = vld [vmem:[#allocation2 + $0x138] sm:$0xff]
    %v117 = vld [vmem:[#allocation2 + $0x140] sm:$0xff]
    %v118 = vld [vmem:[#allocation2 + $0x148] sm:$0xff]
    %v119 = vld [vmem:[#allocation2 + $0x150] sm:$0xff]
    %v120 = vld [vmem:[#allocation2 + $0x158] sm:$0xff]
    %v121 = vld [vmem:[#allocation2 + $0x160] sm:$0xff]
    %v122 = vld [vmem:[#allocation2 + $0x168] sm:$0xff]
    %v123 = vld [vmem:[#allocation2 + $0x170] sm:$0xff]
    %v124 = vld [vmem:[#allocation2 + $0x178] sm:$0xff]
    %v125 = vld [vmem:[#allocation2 + $0x180] sm:$0xff]
    %v126 = vld [vmem:[#allocation2 + $0x188] sm:$0xff]
    %v127 = vld [vmem:[#allocation2 + $0x190] sm:$0xff]
    %v128 = vld [vmem:[#allocation2 + $0x198] sm:$0xff]
    %v129 = vld [vmem:[#allocation2 + $0x1a0] sm:$0xff]
    %v130 = vld [vmem:[#allocation2 + $0x1a8] sm:$0xff]
    %v131 = vld [vmem:[#allocation2 + $0x1b0] sm:$0xff]
    %v132 = vld [vmem:[#allocation2 + $0x1b8] sm:$0xff]
    %v133 = vld [vmem:[#allocation2 + $0x1c0] sm:$0xff]
    %v134 = vld [vmem:[#allocation2 + $0x1c8] sm:$0xff]
    %v135 = vld [vmem:[#allocation2 + $0x1d0] sm:$0xff]
    %v136 = vld [vmem:[#allocation2 + $0x1d8] sm:$0xff]
    %v137 = vld [vmem:[#allocation2 + $0x1e0] sm:$0xff]
    %v138 = vld [vmem:[#allocation2 + $0x1e8] sm:$0xff]
    %v139 = vld [vmem:[#allocation2 + $0x1f0] sm:$0xff]
    %v140 = vld [vmem:[#allocation2 + $0x1f8] sm:$0xff]
    %v141 = vld [vmem:[#allocation2 + $0x200] sm:$0xff]
    %v142 = vld [vmem:[#allocation2 + $0x208] sm:$0xff]
    %v143 = vld [vmem:[#allocation2 + $0x210] sm:$0xff]
    %v144 = vld [vmem:[#allocation2 + $0x218] sm:$0xff]
    %v145 = vld [vmem:[#allocation2 + $0x220] sm:$0xff]
    %v146 = vld [vmem:[#allocation2 + $0x228] sm:$0xff]
    %v147 = vld [vmem:[#allocation2 + $0x230] sm:$0xff]
    %v148 = vld [vmem:[#allocation2 + $0x238] sm:$0xff]
    %v149 = vld [vmem:[#allocation2 + $0x240] sm:$0xff]
    %v150 = vld [vmem:[#allocation2 + $0x248] sm:$0xff]
    %v151 = vld [vmem:[#allocation2 + $0x250] sm:$0xff]
    %v152 = vld [vmem:[#allocation2 + $0x258] sm:$0xff]
    %v153 = vld [vmem:[#allocation2 + $0x260] sm:$0xff]
    %v154 = vld [vmem:[#allocation2 + $0x268] sm:$0xff]
    %v155 = vld [vmem:[#allocation2 + $0x270] sm:$0xff]
    %v156 = vld [vmem:[#allocation2 + $0x278] sm:$0xff]
    %v157 = vld [vmem:[#allocation2 + $0x280] sm:$0xff]
    %v158 = vld [vmem:[#allocation2 + $0x288] sm:$0xff]
    %v159 = vld [vmem:[#allocation2 + $0x290] sm:$0xff]
    %v160 = vld [vmem:[#allocation2 + $0x298] sm:$0xff]
    %v161 = vld [vmem:[#allocation2 + $0x2a0] sm:$0xff]
    %v162 = vld [vmem:[#allocation2 + $0x2a8] sm:$0xff]
    %v163 = vld [vmem:[#allocation2 + $0x2b0] sm:$0xff]
    %v164 = vld [vmem:[#allocation2 + $0x2b8] sm:$0xff]
    %v165 = vld [vmem:[#allocation2 + $0x2c0] sm:$0xff]
    %v166 = vld [vmem:[#allocation2 + $0x2c8] sm:$0xff]
    %v167 = vld [vmem:[#allocation2 + $0x2d0] sm:$0xff]
    %v168 = vld [vmem:[#allocation2 + $0x2d8] sm:$0xff]
    %v169 = vld [vmem:[#allocation2 + $0x2e0] sm:$0xff]
    %v170 = vld [vmem:[#allocation2 + $0x2e8] sm:$0xff]
    %v171 = vld [vmem:[#allocation2 + $0x2f0] sm:$0xff]
    %v172 = vld [vmem:[#allocation2 + $0x2f8] sm:$0xff]
    %v173 = vld [vmem:[%s2] sm:$0xf]
    %v175 = vperm.slane %v173, 0
    %v176 = vperm.slane %v173, 1
    %v177 = vperm.slane %v173, 2
    %v178 = vperm.slane %v173, 3
    %v187 = vunpack.c.l.b16 %v73
    %v188 = vunpack.c.h.b16 %v73
    %v189 = vunpack.c.l.b16 %v74
    %v190 = vunpack.c.l.b16 %v75
    %v191 = vunpack.c.h.b16 %v75
    %v192 = vunpack.c.l.b16 %v76
    %v193 = vpack.c.b16 %v190, %v187
    %v194 = vpack.c.b16 %v191, %v188
    %v195 = vpack.c.b16 %v192, %v189
    %v295 = vunpack.c.l.b16 %v77
    %v296 = vunpack.c.h.b16 %v77
    %v297 = vunpack.c.l.b16 %v78
    %v298 = vunpack.c.h.b16 %v78
    %v299 = vunpack.c.l.b16 %v79
    %v300 = vunpack.c.h.b16 %v79
    %v301 = vunpack.c.l.b16 %v80
    %v302 = vunpack.c.h.b16 %v80
    %v303 = vunpack.c.l.b16 %v81
    %v304 = vunpack.c.h.b16 %v81
    %v305 = vunpack.c.l.b16 %v82
    %v306 = vunpack.c.h.b16 %v82
    %v307 = vunpack.c.l.b16 %v83
    %v308 = vunpack.c.h.b16 %v83
    %v309 = vunpack.c.l.b16 %v84
    %v310 = vunpack.c.h.b16 %v84
    %v311 = vunpack.c.l.b16 %v85
    %v312 = vunpack.c.h.b16 %v85
    %v313 = vunpack.c.l.b16 %v86
    %v314 = vunpack.c.h.b16 %v86
    %v315 = vunpack.c.l.b16 %v87
    %v316 = vunpack.c.h.b16 %v87
    %v317 = vunpack.c.l.b16 %v88
    %v318 = vunpack.c.h.b16 %v88
    %v319 = vunpack.c.l.b16 %v89
    %v320 = vunpack.c.h.b16 %v89
    %v321 = vunpack.c.l.b16 %v90
    %v322 = vunpack.c.h.b16 %v90
    %v323 = vunpack.c.l.b16 %v91
    %v324 = vunpack.c.h.b16 %v91
    %v325 = vunpack.c.l.b16 %v92
    %v326 = vunpack.c.h.b16 %v92
    %v327 = vunpack.c.l.b16 %v93
    %v328 = vunpack.c.h.b16 %v93
    %v329 = vunpack.c.l.b16 %v94
    %v330 = vunpack.c.h.b16 %v94
    %v331 = vunpack.c.l.b16 %v95
    %v332 = vunpack.c.h.b16 %v95
    %v333 = vunpack.c.l.b16 %v96
    %v334 = vunpack.c.h.b16 %v96
    %v335 = vunpack.c.l.b16 %v97
    %v336 = vunpack.c.h.b16 %v97
    %v337 = vunpack.c.l.b16 %v98
    %v338 = vunpack.c.h.b16 %v98
    %v339 = vunpack.c.l.b16 %v99
    %v340 = vunpack.c.h.b16 %v99
    %v341 = vunpack.c.l.b16 %v100
    %v342 = vunpack.c.h.b16 %v100
    %v343 = vunpack.c.l.b16 %v101
    %v344 = vunpack.c.h.b16 %v101
    %v345 = vunpack.c.l.b16 %v102
    %v346 = vunpack.c.h.b16 %v102
    %v347 = vunpack.c.l.b16 %v103
    %v348 = vunpack.c.h.b16 %v103
    %v349 = vunpack.c.l.b16 %v104
    %v350 = vunpack.c.h.b16 %v104
    %v351 = vunpack.c.l.b16 %v105
    %v352 = vunpack.c.h.b16 %v105
    %v353 = vunpack.c.l.b16 %v106
    %v354 = vunpack.c.h.b16 %v106
    %v355 = vunpack.c.l.b16 %v107
    %v356 = vunpack.c.h.b16 %v107
    %v357 = vunpack.c.l.b16 %v108
    %v358 = vunpack.c.h.b16 %v108
    %v359 = vunpack.c.l.b16 %v109
    %v360 = vunpack.c.h.b16 %v109
    %v361 = vunpack.c.l.b16 %v110
    %v362 = vunpack.c.h.b16 %v110
    %v363 = vunpack.c.l.b16 %v111
    %v364 = vunpack.c.h.b16 %v111
    %v365 = vunpack.c.l.b16 %v112
    %v366 = vunpack.c.h.b16 %v112
    %v367 = vunpack.c.l.b16 %v113
    %v368 = vunpack.c.h.b16 %v113
    %v369 = vunpack.c.l.b16 %v114
    %v370 = vunpack.c.h.b16 %v114
    %v371 = vunpack.c.l.b16 %v115
    %v372 = vunpack.c.h.b16 %v115
    %v373 = vunpack.c.l.b16 %v116
    %v374 = vunpack.c.h.b16 %v116
    %v375 = vunpack.c.l.b16 %v117
    %v376 = vunpack.c.h.b16 %v117
    %v377 = vunpack.c.l.b16 %v118
    %v378 = vunpack.c.h.b16 %v118
    %v379 = vunpack.c.l.b16 %v119
    %v380 = vunpack.c.h.b16 %v119
    %v381 = vunpack.c.l.b16 %v120
    %v382 = vunpack.c.h.b16 %v120
    %v383 = vunpack.c.l.b16 %v121
    %v384 = vunpack.c.h.b16 %v121
    %v385 = vunpack.c.l.b16 %v122
    %v386 = vunpack.c.h.b16 %v122
    %v387 = vunpack.c.l.b16 %v123
    %v388 = vunpack.c.h.b16 %v123
    %v389 = vunpack.c.l.b16 %v124
    %v390 = vunpack.c.h.b16 %v124
    %v391 = vunpack.c.l.b16 %v125
    %v392 = vunpack.c.h.b16 %v125
    %v393 = vunpack.c.l.b16 %v126
    %v394 = vunpack.c.h.b16 %v126
    %v395 = vunpack.c.l.b16 %v127
    %v396 = vunpack.c.h.b16 %v127
    %v397 = vunpack.c.l.b16 %v128
    %v398 = vunpack.c.h.b16 %v128
    %v399 = vunpack.c.l.b16 %v129
    %v400 = vunpack.c.h.b16 %v129
    %v401 = vunpack.c.l.b16 %v130
    %v402 = vunpack.c.h.b16 %v130
    %v403 = vunpack.c.l.b16 %v131
    %v404 = vunpack.c.h.b16 %v131
    %v405 = vunpack.c.l.b16 %v132
    %v406 = vunpack.c.h.b16 %v132
    %v407 = vunpack.c.l.b16 %v133
    %v408 = vunpack.c.h.b16 %v133
    %v409 = vunpack.c.l.b16 %v134
    %v410 = vunpack.c.h.b16 %v134
    %v411 = vunpack.c.l.b16 %v135
    %v412 = vunpack.c.h.b16 %v135
    %v413 = vunpack.c.l.b16 %v136
    %v414 = vunpack.c.h.b16 %v136
    %v415 = vunpack.c.l.b16 %v137
    %v416 = vunpack.c.h.b16 %v137
    %v417 = vunpack.c.l.b16 %v138
    %v418 = vunpack.c.h.b16 %v138
    %v419 = vunpack.c.l.b16 %v139
    %v420 = vunpack.c.h.b16 %v139
    %v421 = vunpack.c.l.b16 %v140
    %v422 = vunpack.c.h.b16 %v140
    %v423 = vunpack.c.l.b16 %v141
    %v424 = vunpack.c.h.b16 %v141
    %v425 = vunpack.c.l.b16 %v142
    %v426 = vunpack.c.h.b16 %v142
    %v427 = vunpack.c.l.b16 %v143
    %v428 = vunpack.c.h.b16 %v143
    %v429 = vunpack.c.l.b16 %v144
    %v430 = vunpack.c.h.b16 %v144
    %v431 = vunpack.c.l.b16 %v145
    %v432 = vunpack.c.h.b16 %v145
    %v433 = vunpack.c.l.b16 %v146
    %v434 = vunpack.c.h.b16 %v146
    %v435 = vunpack.c.l.b16 %v147
    %v436 = vunpack.c.h.b16 %v147
    %v437 = vunpack.c.l.b16 %v148
    %v438 = vunpack.c.h.b16 %v148
    %v439 = vunpack.c.l.b16 %v149
    %v440 = vunpack.c.h.b16 %v149
    %v441 = vunpack.c.l.b16 %v150
    %v442 = vunpack.c.h.b16 %v150
    %v443 = vunpack.c.l.b16 %v151
    %v444 = vunpack.c.h.b16 %v151
    %v445 = vunpack.c.l.b16 %v152
    %v446 = vunpack.c.h.b16 %v152
    %v447 = vunpack.c.l.b16 %v153
    %v448 = vunpack.c.h.b16 %v153
    %v449 = vunpack.c.l.b16 %v154
    %v450 = vunpack.c.h.b16 %v154
    %v451 = vunpack.c.l.b16 %v155
    %v452 = vunpack.c.h.b16 %v155
    %v453 = vunpack.c.l.b16 %v156
    %v454 = vunpack.c.h.b16 %v156
    %v455 = vunpack.c.l.b16 %v157
    %v456 = vunpack.c.h.b16 %v157
    %v457 = vunpack.c.l.b16 %v158
    %v458 = vunpack.c.h.b16 %v158
    %v459 = vunpack.c.l.b16 %v159
    %v460 = vunpack.c.h.b16 %v159
    %v461 = vunpack.c.l.b16 %v160
    %v462 = vunpack.c.h.b16 %v160
    %v463 = vunpack.c.l.b16 %v161
    %v464 = vunpack.c.h.b16 %v161
    %v465 = vunpack.c.l.b16 %v162
    %v466 = vunpack.c.h.b16 %v162
    %v467 = vunpack.c.l.b16 %v163
    %v468 = vunpack.c.h.b16 %v163
    %v469 = vunpack.c.l.b16 %v164
    %v470 = vunpack.c.h.b16 %v164
    %v471 = vunpack.c.l.b16 %v165
    %v472 = vunpack.c.h.b16 %v165
    %v473 = vunpack.c.l.b16 %v166
    %v474 = vunpack.c.h.b16 %v166
    %v475 = vunpack.c.l.b16 %v167
    %v476 = vunpack.c.h.b16 %v167
    %v477 = vunpack.c.l.b16 %v168
    %v478 = vunpack.c.h.b16 %v168
    %v479 = vunpack.c.l.b16 %v169
    %v480 = vunpack.c.h.b16 %v169
    %v481 = vunpack.c.l.b16 %v170
    %v482 = vunpack.c.h.b16 %v170
    %v483 = vunpack.c.l.b16 %v171
    %v484 = vunpack.c.h.b16 %v171
    %v485 = vunpack.c.l.b16 %v172
    %v486 = vunpack.c.h.b16 %v172
    %v487 = vpack.c.b16 %v299, %v295
    %v488 = vpack.c.b16 %v300, %v296
    %v489 = vpack.c.b16 %v301, %v297
    %v490 = vpack.c.b16 %v302, %v298
    %v491 = vpack.c.b16 %v307, %v303
    %v492 = vpack.c.b16 %v308, %v304
    %v493 = vpack.c.b16 %v309, %v305
    %v494 = vpack.c.b16 %v310, %v306
    %v495 = vpack.c.b16 %v315, %v311
    %v496 = vpack.c.b16 %v316, %v312
    %v497 = vpack.c.b16 %v317, %v313
    %v498 = vpack.c.b16 %v318, %v314
    %v499 = vpack.c.b16 %v323, %v319
    %v500 = vpack.c.b16 %v324, %v320
    %v501 = vpack.c.b16 %v325, %v321
    %v502 = vpack.c.b16 %v326, %v322
    %v503 = vpack.c.b16 %v331, %v327
    %v504 = vpack.c.b16 %v332, %v328
    %v505 = vpack.c.b16 %v333, %v329
    %v506 = vpack.c.b16 %v334, %v330
    %v507 = vpack.c.b16 %v339, %v335
    %v508 = vpack.c.b16 %v340, %v336
    %v509 = vpack.c.b16 %v341, %v337
    %v510 = vpack.c.b16 %v342, %v338
    %v511 = vpack.c.b16 %v347, %v343
    %v512 = vpack.c.b16 %v348, %v344
    %v513 = vpack.c.b16 %v349, %v345
    %v514 = vpack.c.b16 %v350, %v346
    %v515 = vpack.c.b16 %v355, %v351
    %v516 = vpack.c.b16 %v356, %v352
    %v517 = vpack.c.b16 %v357, %v353
    %v518 = vpack.c.b16 %v358, %v354
    %v519 = vpack.c.b16 %v363, %v359
    %v520 = vpack.c.b16 %v364, %v360
    %v521 = vpack.c.b16 %v365, %v361
    %v522 = vpack.c.b16 %v366, %v362
    %v523 = vpack.c.b16 %v371, %v367
    %v524 = vpack.c.b16 %v372, %v368
    %v525 = vpack.c.b16 %v373, %v369
    %v526 = vpack.c.b16 %v374, %v370
    %v527 = vpack.c.b16 %v379, %v375
    %v528 = vpack.c.b16 %v380, %v376
    %v529 = vpack.c.b16 %v381, %v377
    %v530 = vpack.c.b16 %v382, %v378
    %v531 = vpack.c.b16 %v387, %v383
    %v532 = vpack.c.b16 %v388, %v384
    %v533 = vpack.c.b16 %v389, %v385
    %v534 = vpack.c.b16 %v390, %v386
    %v535 = vpack.c.b16 %v395, %v391
    %v536 = vpack.c.b16 %v396, %v392
    %v537 = vpack.c.b16 %v397, %v393
    %v538 = vpack.c.b16 %v398, %v394
    %v539 = vpack.c.b16 %v403, %v399
    %v540 = vpack.c.b16 %v404, %v400
    %v541 = vpack.c.b16 %v405, %v401
    %v542 = vpack.c.b16 %v406, %v402
    %v543 = vpack.c.b16 %v411, %v407
    %v544 = vpack.c.b16 %v412, %v408
    %v545 = vpack.c.b16 %v413, %v409
    %v546 = vpack.c.b16 %v414, %v410
    %v547 = vpack.c.b16 %v419, %v415
    %v548 = vpack.c.b16 %v420, %v416
    %v549 = vpack.c.b16 %v421, %v417
    %v550 = vpack.c.b16 %v422, %v418
    %v551 = vpack.c.b16 %v427, %v423
    %v552 = vpack.c.b16 %v428, %v424
    %v553 = vpack.c.b16 %v429, %v425
    %v554 = vpack.c.b16 %v430, %v426
    %v555 = vpack.c.b16 %v435, %v431
    %v556 = vpack.c.b16 %v436, %v432
    %v557 = vpack.c.b16 %v437, %v433
    %v558 = vpack.c.b16 %v438, %v434
    %v559 = vpack.c.b16 %v443, %v439
    %v560 = vpack.c.b16 %v444, %v440
    %v561 = vpack.c.b16 %v445, %v441
    %v562 = vpack.c.b16 %v446, %v442
    %v563 = vpack.c.b16 %v451, %v447
    %v564 = vpack.c.b16 %v452, %v448
    %v565 = vpack.c.b16 %v453, %v449
    %v566 = vpack.c.b16 %v454, %v450
    %v567 = vpack.c.b16 %v459, %v455
    %v568 = vpack.c.b16 %v460, %v456
    %v569 = vpack.c.b16 %v461, %v457
    %v570 = vpack.c.b16 %v462, %v458
    %v571 = vpack.c.b16 %v467, %v463
    %v572 = vpack.c.b16 %v468, %v464
    %v573 = vpack.c.b16 %v469, %v465
    %v574 = vpack.c.b16 %v470, %v466
    %v575 = vpack.c.b16 %v475, %v471
    %v576 = vpack.c.b16 %v476, %v472
    %v577 = vpack.c.b16 %v477, %v473
    %v578 = vpack.c.b16 %v478, %v474
    %v579 = vpack.c.b16 %v483, %v479
    %v580 = vpack.c.b16 %v484, %v480
    %v581 = vpack.c.b16 %v485, %v481
    %v582 = vpack.c.b16 %v486, %v482
    %679 = vmatpush.bf16.msra.mxu0 %v515
    %680 = vmatpush.bf16.msra.mxu0 %v511
    %681 = vmatpush.bf16.msra.mxu0 %v507
    %682 = vmatpush.bf16.msra.mxu0 %v503
    %683 = vmatpush.bf16.msra.mxu0 %v499
    %684 = vmatpush.bf16.msra.mxu0 %v495
    %685 = vmatpush.bf16.msra.mxu0 %v491
    %686 = vmatpush.bf16.msra.mxu0 %v487
    %687 = vmatmul.bf16.gmra.mxu0 %v193
    %v688 = vpop.f32.mrf.mxu0
    %v689 = vadd.f32 %v175, %v688
    %v690 = vpop.f32.mrf.mxu0
    %v691 = vadd.f32 %v175, %v690
    %692 = vdwg.mxu0
    %693 = vmatpush.bf16.msra.mxu0 %v547
    %694 = vmatpush.bf16.msra.mxu0 %v543
    %695 = vmatpush.bf16.msra.mxu0 %v539
    %696 = vmatpush.bf16.msra.mxu0 %v535
    %697 = vmatpush.bf16.msra.mxu0 %v531
    %698 = vmatpush.bf16.msra.mxu0 %v527
    %699 = vmatpush.bf16.msra.mxu0 %v523
    %700 = vmatpush.bf16.msra.mxu0 %v519
    %701 = vmatmul.bf16.gmra.mxu0 %v194
    %v702 = vpop.f32.mrf.mxu0
    %v703 = vadd.f32 %v689, %v702
    %v704 = vpop.f32.mrf.mxu0
    %v705 = vadd.f32 %v691, %v704
    %706 = vdwg.mxu0
    %707 = vmatpush.bf16.msra.mxu0 %v579
    %708 = vmatpush.bf16.msra.mxu0 %v575
    %709 = vmatpush.bf16.msra.mxu0 %v571
    %710 = vmatpush.bf16.msra.mxu0 %v567
    %711 = vmatpush.bf16.msra.mxu0 %v563
    %712 = vmatpush.bf16.msra.mxu0 %v559
    %713 = vmatpush.bf16.msra.mxu0 %v555
    %714 = vmatpush.bf16.msra.mxu0 %v551
    %715 = vmatmul.bf16.gmra.mxu0 %v195
    %v716 = vpop.f32.mrf.mxu0
    %v717 = vadd.f32 %v703, %v716
    %v718 = vpop.f32.mrf.mxu0
    %v719 = vadd.f32 %v705, %v718
    %720 = vdwg.mxu0
    %721 = vmatpush.bf16.msra.mxu0 %v516
    %722 = vmatpush.bf16.msra.mxu0 %v512
    %723 = vmatpush.bf16.msra.mxu0 %v508
    %724 = vmatpush.bf16.msra.mxu0 %v504
    %725 = vmatpush.bf16.msra.mxu0 %v500
    %726 = vmatpush.bf16.msra.mxu0 %v496
    %727 = vmatpush.bf16.msra.mxu0 %v492
    %728 = vmatpush.bf16.msra.mxu0 %v488
    %729 = vmatmul.bf16.gmra.mxu0 %v193
    %v730 = vpop.f32.mrf.mxu0
    %v731 = vadd.f32 %v176, %v730
    %v732 = vpop.f32.mrf.mxu0
    %v733 = vadd.f32 %v176, %v732
    %734 = vdwg.mxu0
    %735 = vmatpush.bf16.msra.mxu0 %v548
    %736 = vmatpush.bf16.msra.mxu0 %v544
    %737 = vmatpush.bf16.msra.mxu0 %v540
    %738 = vmatpush.bf16.msra.mxu0 %v536
    %739 = vmatpush.bf16.msra.mxu0 %v532
    %740 = vmatpush.bf16.msra.mxu0 %v528
    %741 = vmatpush.bf16.msra.mxu0 %v524
    %742 = vmatpush.bf16.msra.mxu0 %v520
    %743 = vmatmul.bf16.gmra.mxu0 %v194
    %v744 = vpop.f32.mrf.mxu0
    %v745 = vadd.f32 %v731, %v744
    %v746 = vpop.f32.mrf.mxu0
    %v747 = vadd.f32 %v733, %v746
    %748 = vdwg.mxu0
    %749 = vmatpush.bf16.msra.mxu0 %v580
    %750 = vmatpush.bf16.msra.mxu0 %v576
    %751 = vmatpush.bf16.msra.mxu0 %v572
    %752 = vmatpush.bf16.msra.mxu0 %v568
    %753 = vmatpush.bf16.msra.mxu0 %v564
    %754 = vmatpush.bf16.msra.mxu0 %v560
    %755 = vmatpush.bf16.msra.mxu0 %v556
    %756 = vmatpush.bf16.msra.mxu0 %v552
    %757 = vmatmul.bf16.gmra.mxu0 %v195
    %v758 = vpop.f32.mrf.mxu0
    %v759 = vadd.f32 %v745, %v758
    %v760 = vpop.f32.mrf.mxu0
    %v761 = vadd.f32 %v747, %v760
    %762 = vdwg.mxu0
    %763 = vmatpush.bf16.msra.mxu0 %v517
    %764 = vmatpush.bf16.msra.mxu0 %v513
    %765 = vmatpush.bf16.msra.mxu0 %v509
    %766 = vmatpush.bf16.msra.mxu0 %v505
    %767 = vmatpush.bf16.msra.mxu0 %v501
    %768 = vmatpush.bf16.msra.mxu0 %v497
    %769 = vmatpush.bf16.msra.mxu0 %v493
    %770 = vmatpush.bf16.msra.mxu0 %v489
    %771 = vmatmul.bf16.gmra.mxu0 %v193
    %v772 = vpop.f32.mrf.mxu0
    %v773 = vadd.f32 %v177, %v772
    %v774 = vpop.f32.mrf.mxu0
    %v775 = vadd.f32 %v177, %v774
    %776 = vdwg.mxu0
    %777 = vmatpush.bf16.msra.mxu0 %v549
    %778 = vmatpush.bf16.msra.mxu0 %v545
    %779 = vmatpush.bf16.msra.mxu0 %v541
    %780 = vmatpush.bf16.msra.mxu0 %v537
    %781 = vmatpush.bf16.msra.mxu0 %v533
    %782 = vmatpush.bf16.msra.mxu0 %v529
    %783 = vmatpush.bf16.msra.mxu0 %v525
    %784 = vmatpush.bf16.msra.mxu0 %v521
    %785 = vmatmul.bf16.gmra.mxu0 %v194
    %v786 = vpop.f32.mrf.mxu0
    %v787 = vadd.f32 %v773, %v786
    %v788 = vpop.f32.mrf.mxu0
    %v789 = vadd.f32 %v775, %v788
    %790 = vdwg.mxu0
    %791 = vmatpush.bf16.msra.mxu0 %v581
    %792 = vmatpush.bf16.msra.mxu0 %v577
    %793 = vmatpush.bf16.msra.mxu0 %v573
    %794 = vmatpush.bf16.msra.mxu0 %v569
    %795 = vmatpush.bf16.msra.mxu0 %v565
    %796 = vmatpush.bf16.msra.mxu0 %v561
    %797 = vmatpush.bf16.msra.mxu0 %v557
    %798 = vmatpush.bf16.msra.mxu0 %v553
    %799 = vmatmul.bf16.gmra.mxu0 %v195
    %v800 = vpop.f32.mrf.mxu0
    %v801 = vadd.f32 %v787, %v800
    %v802 = vpop.f32.mrf.mxu0
    %v803 = vadd.f32 %v789, %v802
    %804 = vdwg.mxu0
    %805 = vmatpush.bf16.msra.mxu0 %v518
    %806 = vmatpush.bf16.msra.mxu0 %v514
    %807 = vmatpush.bf16.msra.mxu0 %v510
    %808 = vmatpush.bf16.msra.mxu0 %v506
    %809 = vmatpush.bf16.msra.mxu0 %v502
    %810 = vmatpush.bf16.msra.mxu0 %v498
    %811 = vmatpush.bf16.msra.mxu0 %v494
    %812 = vmatpush.bf16.msra.mxu0 %v490
    %813 = vmatmul.bf16.gmra.mxu0 %v193
    %v814 = vpop.f32.mrf.mxu0
    %v815 = vadd.f32 %v178, %v814
    %v816 = vpop.f32.mrf.mxu0
    %v817 = vadd.f32 %v178, %v816
    %818 = vdwg.mxu0
    %819 = vmatpush.bf16.msra.mxu0 %v550
    %820 = vmatpush.bf16.msra.mxu0 %v546
    %821 = vmatpush.bf16.msra.mxu0 %v542
    %822 = vmatpush.bf16.msra.mxu0 %v538
    %823 = vmatpush.bf16.msra.mxu0 %v534
    %824 = vmatpush.bf16.msra.mxu0 %v530
    %825 = vmatpush.bf16.msra.mxu0 %v526
    %826 = vmatpush.bf16.msra.mxu0 %v522
    %827 = vmatmul.bf16.gmra.mxu0 %v194
    %v828 = vpop.f32.mrf.mxu0
    %v829 = vadd.f32 %v815, %v828
    %v830 = vpop.f32.mrf.mxu0
    %v831 = vadd.f32 %v817, %v830
    %832 = vdwg.mxu0
    %833 = vmatpush.bf16.msra.mxu0 %v582
    %834 = vmatpush.bf16.msra.mxu0 %v578
    %835 = vmatpush.bf16.msra.mxu0 %v574
    %836 = vmatpush.bf16.msra.mxu0 %v570
    %837 = vmatpush.bf16.msra.mxu0 %v566
    %838 = vmatpush.bf16.msra.mxu0 %v562
    %839 = vmatpush.bf16.msra.mxu0 %v558
    %840 = vmatpush.bf16.msra.mxu0 %v554
    %841 = vmatmul.bf16.gmra.mxu0 %v195
    %v842 = vpop.f32.mrf.mxu0
    %v843 = vadd.f32 %v829, %v842
    %v844 = vpop.f32.mrf.mxu0
    %v845 = vadd.f32 %v831, %v844
    %846 = vdwg.mxu0
    %v847 = vmax.f32 %v717, 0.0
    %v848 = vmax.f32 %v759, 0.0
    %v849 = vmax.f32 %v801, 0.0
    %v850 = vmax.f32 %v843, 0.0
    %v851 = vmax.f32 %v719, 0.0
    %v852 = vmax.f32 %v761, 0.0
    %v853 = vmax.f32 %v803, 0.0
    %v854 = vmax.f32 %v845, 0.0
    %v855 = vpack.c.bf16 %v851, %v847
    %v856 = vpack.c.bf16 %v852, %v848
    %v857 = vpack.c.bf16 %v853, %v849
    %v858 = vpack.c.bf16 %v854, %v850
    %v859 = vld [vmem:[#allocation4] sm:$0xff]
    %v860 = vld [vmem:[#allocation4 + $0x8] sm:$0xff]
    %v861 = vld [vmem:[#allocation4 + $0x10] sm:$0xff]
    %v862 = vld [vmem:[#allocation4 + $0x18] sm:$0xff]
    %v863 = vld [vmem:[#allocation4 + $0x20] sm:$0xff]
    %v864 = vld [vmem:[#allocation4 + $0x28] sm:$0xff]
    %v865 = vld [vmem:[#allocation4 + $0x30] sm:$0xff]
    %v866 = vld [vmem:[#allocation4 + $0x38] sm:$0xff]
    %v867 = vld [vmem:[#allocation4 + $0x40] sm:$0xff]
    %v868 = vld [vmem:[#allocation4 + $0x48] sm:$0xff]
    %v869 = vld [vmem:[#allocation4 + $0x50] sm:$0xff]
    %v870 = vld [vmem:[#allocation4 + $0x58] sm:$0xff]
    %v871 = vld [vmem:[#allocation4 + $0x60] sm:$0xff]
    %v872 = vld [vmem:[#allocation4 + $0x68] sm:$0xff]
    %v873 = vld [vmem:[#allocation4 + $0x70] sm:$0xff]
    %v874 = vld [vmem:[#allocation4 + $0x78] sm:$0xff]
    %v875 = vld [vmem:[#allocation4 + $0x80] sm:$0xff]
    %v876 = vld [vmem:[#allocation4 + $0x88] sm:$0xff]
    %v877 = vld [vmem:[#allocation4 + $0x90] sm:$0xff]
    %v878 = vld [vmem:[#allocation4 + $0x98] sm:$0xff]
    %v879 = vld [vmem:[#allocation4 + $0xa0] sm:$0xff]
    %v880 = vld [vmem:[#allocation4 + $0xa8] sm:$0xff]
    %v881 = vld [vmem:[#allocation4 + $0xb0] sm:$0xff]
    %v882 = vld [vmem:[#allocation4 + $0xb8] sm:$0xff]
    %v883 = vld [vmem:[#allocation4 + $0xc0] sm:$0xff]
    %v884 = vld [vmem:[#allocation4 + $0xc8] sm:$0xff]
    %v885 = vld [vmem:[#allocation4 + $0xd0] sm:$0xff]
    %v886 = vld [vmem:[#allocation4 + $0xd8] sm:$0xff]
    %v887 = vld [vmem:[#allocation4 + $0xe0] sm:$0xff]
    %v888 = vld [vmem:[#allocation4 + $0xe8] sm:$0xff]
    %v889 = vld [vmem:[#allocation4 + $0xf0] sm:$0xff]
    %v890 = vld [vmem:[#allocation4 + $0xf8] sm:$0xff]
    %v891 = vld [vmem:[#allocation4 + $0x100] sm:$0xff]
    %v892 = vld [vmem:[#allocation4 + $0x108] sm:$0xff]
    %v893 = vld [vmem:[#allocation4 + $0x110] sm:$0xff]
    %v894 = vld [vmem:[#allocation4 + $0x118] sm:$0xff]
    %v895 = vld [vmem:[#allocation4 + $0x120] sm:$0xff]
    %v896 = vld [vmem:[#allocation4 + $0x128] sm:$0xff]
    %v897 = vld [vmem:[#allocation4 + $0x130] sm:$0xff]
    %v898 = vld [vmem:[#allocation4 + $0x138] sm:$0xff]
    %v899 = vld [vmem:[#allocation4 + $0x140] sm:$0xff]
    %v900 = vld [vmem:[#allocation4 + $0x148] sm:$0xff]
    %v901 = vld [vmem:[#allocation4 + $0x150] sm:$0xff]
    %v902 = vld [vmem:[#allocation4 + $0x158] sm:$0xff]
    %v903 = vld [vmem:[#allocation4 + $0x160] sm:$0xff]
    %v904 = vld [vmem:[#allocation4 + $0x168] sm:$0xff]
    %v905 = vld [vmem:[#allocation4 + $0x170] sm:$0xff]
    %v906 = vld [vmem:[#allocation4 + $0x178] sm:$0xff]
    %v907 = vld [vmem:[#allocation4 + $0x180] sm:$0xff]
    %v908 = vld [vmem:[#allocation4 + $0x188] sm:$0xff]
    %v909 = vld [vmem:[#allocation4 + $0x190] sm:$0xff]
    %v910 = vld [vmem:[#allocation4 + $0x198] sm:$0xff]
    %v911 = vld [vmem:[#allocation4 + $0x1a0] sm:$0xff]
    %v912 = vld [vmem:[#allocation4 + $0x1a8] sm:$0xff]
    %v913 = vld [vmem:[#allocation4 + $0x1b0] sm:$0xff]
    %v914 = vld [vmem:[#allocation4 + $0x1b8] sm:$0xff]
    %v915 = vld [vmem:[#allocation4 + $0x1c0] sm:$0xff]
    %v916 = vld [vmem:[#allocation4 + $0x1c8] sm:$0xff]
    %v917 = vld [vmem:[#allocation4 + $0x1d0] sm:$0xff]
    %v918 = vld [vmem:[#allocation4 + $0x1d8] sm:$0xff]
    %v919 = vld [vmem:[#allocation4 + $0x1e0] sm:$0xff]
    %v920 = vld [vmem:[#allocation4 + $0x1e8] sm:$0xff]
    %v921 = vld [vmem:[#allocation4 + $0x1f0] sm:$0xff]
    %v922 = vld [vmem:[#allocation4 + $0x1f8] sm:$0xff]
    %v923 = vld [vmem:[%s4] sm:$0x3]
    %v925 = vperm.slane %v923, 0
    %v926 = vperm.slane %v923, 1
    %v993 = vunpack.c.l.b16 %v859
    %v994 = vunpack.c.h.b16 %v859
    %v995 = vunpack.c.l.b16 %v860
    %v996 = vunpack.c.h.b16 %v860
    %v997 = vunpack.c.l.b16 %v861
    %v998 = vunpack.c.h.b16 %v861
    %v999 = vunpack.c.l.b16 %v862
    %v1000 = vunpack.c.h.b16 %v862
    %v1001 = vunpack.c.l.b16 %v863
    %v1002 = vunpack.c.h.b16 %v863
    %v1003 = vunpack.c.l.b16 %v864
    %v1004 = vunpack.c.h.b16 %v864
    %v1005 = vunpack.c.l.b16 %v865
    %v1006 = vunpack.c.h.b16 %v865
    %v1007 = vunpack.c.l.b16 %v866
    %v1008 = vunpack.c.h.b16 %v866
    %v1009 = vunpack.c.l.b16 %v867
    %v1010 = vunpack.c.h.b16 %v867
    %v1011 = vunpack.c.l.b16 %v868
    %v1012 = vunpack.c.h.b16 %v868
    %v1013 = vunpack.c.l.b16 %v869
    %v1014 = vunpack.c.h.b16 %v869
    %v1015 = vunpack.c.l.b16 %v870
    %v1016 = vunpack.c.h.b16 %v870
    %v1017 = vunpack.c.l.b16 %v871
    %v1018 = vunpack.c.h.b16 %v871
    %v1019 = vunpack.c.l.b16 %v872
    %v1020 = vunpack.c.h.b16 %v872
    %v1021 = vunpack.c.l.b16 %v873
    %v1022 = vunpack.c.h.b16 %v873
    %v1023 = vunpack.c.l.b16 %v874
    %v1024 = vunpack.c.h.b16 %v874
    %v1025 = vunpack.c.l.b16 %v875
    %v1026 = vunpack.c.h.b16 %v875
    %v1027 = vunpack.c.l.b16 %v876
    %v1028 = vunpack.c.h.b16 %v876
    %v1029 = vunpack.c.l.b16 %v877
    %v1030 = vunpack.c.h.b16 %v877
    %v1031 = vunpack.c.l.b16 %v878
    %v1032 = vunpack.c.h.b16 %v878
    %v1033 = vunpack.c.l.b16 %v879
    %v1034 = vunpack.c.h.b16 %v879
    %v1035 = vunpack.c.l.b16 %v880
    %v1036 = vunpack.c.h.b16 %v880
    %v1037 = vunpack.c.l.b16 %v881
    %v1038 = vunpack.c.h.b16 %v881
    %v1039 = vunpack.c.l.b16 %v882
    %v1040 = vunpack.c.h.b16 %v882
    %v1041 = vunpack.c.l.b16 %v883
    %v1042 = vunpack.c.h.b16 %v883
    %v1043 = vunpack.c.l.b16 %v884
    %v1044 = vunpack.c.h.b16 %v884
    %v1045 = vunpack.c.l.b16 %v885
    %v1046 = vunpack.c.h.b16 %v885
    %v1047 = vunpack.c.l.b16 %v886
    %v1048 = vunpack.c.h.b16 %v886
    %v1049 = vunpack.c.l.b16 %v887
    %v1050 = vunpack.c.h.b16 %v887
    %v1051 = vunpack.c.l.b16 %v888
    %v1052 = vunpack.c.h.b16 %v888
    %v1053 = vunpack.c.l.b16 %v889
    %v1054 = vunpack.c.h.b16 %v889
    %v1055 = vunpack.c.l.b16 %v890
    %v1056 = vunpack.c.h.b16 %v890
    %v1057 = vunpack.c.l.b16 %v891
    %v1058 = vunpack.c.h.b16 %v891
    %v1059 = vunpack.c.l.b16 %v892
    %v1060 = vunpack.c.h.b16 %v892
    %v1061 = vunpack.c.l.b16 %v893
    %v1062 = vunpack.c.h.b16 %v893
    %v1063 = vunpack.c.l.b16 %v894
    %v1064 = vunpack.c.h.b16 %v894
    %v1065 = vunpack.c.l.b16 %v895
    %v1066 = vunpack.c.h.b16 %v895
    %v1067 = vunpack.c.l.b16 %v896
    %v1068 = vunpack.c.h.b16 %v896
    %v1069 = vunpack.c.l.b16 %v897
    %v1070 = vunpack.c.h.b16 %v897
    %v1071 = vunpack.c.l.b16 %v898
    %v1072 = vunpack.c.h.b16 %v898
    %v1073 = vunpack.c.l.b16 %v899
    %v1074 = vunpack.c.h.b16 %v899
    %v1075 = vunpack.c.l.b16 %v900
    %v1076 = vunpack.c.h.b16 %v900
    %v1077 = vunpack.c.l.b16 %v901
    %v1078 = vunpack.c.h.b16 %v901
    %v1079 = vunpack.c.l.b16 %v902
    %v1080 = vunpack.c.h.b16 %v902
    %v1081 = vunpack.c.l.b16 %v903
    %v1082 = vunpack.c.h.b16 %v903
    %v1083 = vunpack.c.l.b16 %v904
    %v1084 = vunpack.c.h.b16 %v904
    %v1085 = vunpack.c.l.b16 %v905
    %v1086 = vunpack.c.h.b16 %v905
    %v1087 = vunpack.c.l.b16 %v906
    %v1088 = vunpack.c.h.b16 %v906
    %v1089 = vunpack.c.l.b16 %v907
    %v1090 = vunpack.c.h.b16 %v907
    %v1091 = vunpack.c.l.b16 %v908
    %v1092 = vunpack.c.h.b16 %v908
    %v1093 = vunpack.c.l.b16 %v909
    %v1094 = vunpack.c.h.b16 %v909
    %v1095 = vunpack.c.l.b16 %v910
    %v1096 = vunpack.c.h.b16 %v910
    %v1097 = vunpack.c.l.b16 %v911
    %v1098 = vunpack.c.h.b16 %v911
    %v1099 = vunpack.c.l.b16 %v912
    %v1100 = vunpack.c.h.b16 %v912
    %v1101 = vunpack.c.l.b16 %v913
    %v1102 = vunpack.c.h.b16 %v913
    %v1103 = vunpack.c.l.b16 %v914
    %v1104 = vunpack.c.h.b16 %v914
    %v1105 = vunpack.c.l.b16 %v915
    %v1106 = vunpack.c.h.b16 %v915
    %v1107 = vunpack.c.l.b16 %v916
    %v1108 = vunpack.c.h.b16 %v916
    %v1109 = vunpack.c.l.b16 %v917
    %v1110 = vunpack.c.h.b16 %v917
    %v1111 = vunpack.c.l.b16 %v918
    %v1112 = vunpack.c.h.b16 %v918
    %v1113 = vunpack.c.l.b16 %v919
    %v1114 = vunpack.c.h.b16 %v919
    %v1115 = vunpack.c.l.b16 %v920
    %v1116 = vunpack.c.h.b16 %v920
    %v1117 = vunpack.c.l.b16 %v921
    %v1118 = vunpack.c.h.b16 %v921
    %v1119 = vunpack.c.l.b16 %v922
    %v1120 = vunpack.c.h.b16 %v922
    %v1121 = vpack.c.b16 %v995, %v993
    %v1122 = vpack.c.b16 %v996, %v994
    %v1123 = vpack.c.b16 %v999, %v997
    %v1124 = vpack.c.b16 %v1000, %v998
    %v1125 = vpack.c.b16 %v1003, %v1001
    %v1126 = vpack.c.b16 %v1004, %v1002
    %v1127 = vpack.c.b16 %v1007, %v1005
    %v1128 = vpack.c.b16 %v1008, %v1006
    %v1129 = vpack.c.b16 %v1011, %v1009
    %v1130 = vpack.c.b16 %v1012, %v1010
    %v1131 = vpack.c.b16 %v1015, %v1013
    %v1132 = vpack.c.b16 %v1016, %v1014
    %v1133 = vpack.c.b16 %v1019, %v1017
    %v1134 = vpack.c.b16 %v1020, %v1018
    %v1135 = vpack.c.b16 %v1023, %v1021
    %v1136 = vpack.c.b16 %v1024, %v1022
    %v1137 = vpack.c.b16 %v1027, %v1025
    %v1138 = vpack.c.b16 %v1028, %v1026
    %v1139 = vpack.c.b16 %v1031, %v1029
    %v1140 = vpack.c.b16 %v1032, %v1030
    %v1141 = vpack.c.b16 %v1035, %v1033
    %v1142 = vpack.c.b16 %v1036, %v1034
    %v1143 = vpack.c.b16 %v1039, %v1037
    %v1144 = vpack.c.b16 %v1040, %v1038
    %v1145 = vpack.c.b16 %v1043, %v1041
    %v1146 = vpack.c.b16 %v1044, %v1042
    %v1147 = vpack.c.b16 %v1047, %v1045
    %v1148 = vpack.c.b16 %v1048, %v1046
    %v1149 = vpack.c.b16 %v1051, %v1049
    %v1150 = vpack.c.b16 %v1052, %v1050
    %v1151 = vpack.c.b16 %v1055, %v1053
    %v1152 = vpack.c.b16 %v1056, %v1054
    %v1153 = vpack.c.b16 %v1059, %v1057
    %v1154 = vpack.c.b16 %v1060, %v1058
    %v1155 = vpack.c.b16 %v1063, %v1061
    %v1156 = vpack.c.b16 %v1064, %v1062
    %v1157 = vpack.c.b16 %v1067, %v1065
    %v1158 = vpack.c.b16 %v1068, %v1066
    %v1159 = vpack.c.b16 %v1071, %v1069
    %v1160 = vpack.c.b16 %v1072, %v1070
    %v1161 = vpack.c.b16 %v1075, %v1073
    %v1162 = vpack.c.b16 %v1076, %v1074
    %v1163 = vpack.c.b16 %v1079, %v1077
    %v1164 = vpack.c.b16 %v1080, %v1078
    %v1165 = vpack.c.b16 %v1083, %v1081
    %v1166 = vpack.c.b16 %v1084, %v1082
    %v1167 = vpack.c.b16 %v1087, %v1085
    %v1168 = vpack.c.b16 %v1088, %v1086
    %v1169 = vpack.c.b16 %v1091, %v1089
    %v1170 = vpack.c.b16 %v1092, %v1090
    %v1171 = vpack.c.b16 %v1095, %v1093
    %v1172 = vpack.c.b16 %v1096, %v1094
    %v1173 = vpack.c.b16 %v1099, %v1097
    %v1174 = vpack.c.b16 %v1100, %v1098
    %v1175 = vpack.c.b16 %v1103, %v1101
    %v1176 = vpack.c.b16 %v1104, %v1102
    %v1177 = vpack.c.b16 %v1107, %v1105
    %v1178 = vpack.c.b16 %v1108, %v1106
    %v1179 = vpack.c.b16 %v1111, %v1109
    %v1180 = vpack.c.b16 %v1112, %v1110
    %v1181 = vpack.c.b16 %v1115, %v1113
    %v1182 = vpack.c.b16 %v1116, %v1114
    %v1183 = vpack.c.b16 %v1119, %v1117
    %v1184 = vpack.c.b16 %v1120, %v1118
    %1249 = vmatpush.bf16.msra.mxu0 %v1135
    %1250 = vmatpush.bf16.msra.mxu0 %v1133
    %1251 = vmatpush.bf16.msra.mxu0 %v1131
    %1252 = vmatpush.bf16.msra.mxu0 %v1129
    %1253 = vmatpush.bf16.msra.mxu0 %v1127
    %1254 = vmatpush.bf16.msra.mxu0 %v1125
    %1255 = vmatpush.bf16.msra.mxu0 %v1123
    %1256 = vmatpush.bf16.msra.mxu0 %v1121
    %1257 = vmatmul.bf16.gmra.mxu0 %v855
    %v1258 = vpop.f32.mrf.mxu0
    %v1259 = vadd.f32 %v925, %v1258
    %v1260 = vpop.f32.mrf.mxu0
    %v1261 = vadd.f32 %v925, %v1260
    %1262 = vdwg.mxu0
    %1263 = vmatpush.bf16.msra.mxu0 %v1151
    %1264 = vmatpush.bf16.msra.mxu0 %v1149
    %1265 = vmatpush.bf16.msra.mxu0 %v1147
    %1266 = vmatpush.bf16.msra.mxu0 %v1145
    %1267 = vmatpush.bf16.msra.mxu0 %v1143
    %1268 = vmatpush.bf16.msra.mxu0 %v1141
    %1269 = vmatpush.bf16.msra.mxu0 %v1139
    %1270 = vmatpush.bf16.msra.mxu0 %v1137
    %1271 = vmatmul.bf16.gmra.mxu0 %v856
    %v1272 = vpop.f32.mrf.mxu0
    %v1273 = vadd.f32 %v1259, %v1272
    %v1274 = vpop.f32.mrf.mxu0
    %v1275 = vadd.f32 %v1261, %v1274
    %1276 = vdwg.mxu0
    %1277 = vmatpush.bf16.msra.mxu0 %v1167
    %1278 = vmatpush.bf16.msra.mxu0 %v1165
    %1279 = vmatpush.bf16.msra.mxu0 %v1163
    %1280 = vmatpush.bf16.msra.mxu0 %v1161
    %1281 = vmatpush.bf16.msra.mxu0 %v1159
    %1282 = vmatpush.bf16.msra.mxu0 %v1157
    %1283 = vmatpush.bf16.msra.mxu0 %v1155
    %1284 = vmatpush.bf16.msra.mxu0 %v1153
    %1285 = vmatmul.bf16.gmra.mxu0 %v857
    %v1286 = vpop.f32.mrf.mxu0
    %v1287 = vadd.f32 %v1273, %v1286
    %v1288 = vpop.f32.mrf.mxu0
    %v1289 = vadd.f32 %v1275, %v1288
    %1290 = vdwg.mxu0
    %1291 = vmatpush.bf16.msra.mxu0 %v1183
    %1292 = vmatpush.bf16.msra.mxu0 %v1181
    %1293 = vmatpush.bf16.msra.mxu0 %v1179
    %1294 = vmatpush.bf16.msra.mxu0 %v1177
    %1295 = vmatpush.bf16.msra.mxu0 %v1175
    %1296 = vmatpush.bf16.msra.mxu0 %v1173
    %1297 = vmatpush.bf16.msra.mxu0 %v1171
    %1298 = vmatpush.bf16.msra.mxu0 %v1169
    %1299 = vmatmul.bf16.gmra.mxu0 %v858
    %v1300 = vpop.f32.mrf.mxu0
    %v1301 = vadd.f32 %v1287, %v1300
    %v1302 = vpop.f32.mrf.mxu0
    %v1303 = vadd.f32 %v1289, %v1302
    %1304 = vdwg.mxu0
    %1305 = vmatpush.bf16.msra.mxu0 %v1136
    %1306 = vmatpush.bf16.msra.mxu0 %v1134
    %1307 = vmatpush.bf16.msra.mxu0 %v1132
    %1308 = vmatpush.bf16.msra.mxu0 %v1130
    %1309 = vmatpush.bf16.msra.mxu0 %v1128
    %1310 = vmatpush.bf16.msra.mxu0 %v1126
    %1311 = vmatpush.bf16.msra.mxu0 %v1124
    %1312 = vmatpush.bf16.msra.mxu0 %v1122
    %1313 = vmatmul.bf16.gmra.mxu0 %v855
    %v1314 = vpop.f32.mrf.mxu0
    %v1315 = vadd.f32 %v926, %v1314
    %v1316 = vpop.f32.mrf.mxu0
    %v1317 = vadd.f32 %v926, %v1316
    %1318 = vdwg.mxu0
    %1319 = vmatpush.bf16.msra.mxu0 %v1152
    %1320 = vmatpush.bf16.msra.mxu0 %v1150
    %1321 = vmatpush.bf16.msra.mxu0 %v1148
    %1322 = vmatpush.bf16.msra.mxu0 %v1146
    %1323 = vmatpush.bf16.msra.mxu0 %v1144
    %1324 = vmatpush.bf16.msra.mxu0 %v1142
    %1325 = vmatpush.bf16.msra.mxu0 %v1140
    %1326 = vmatpush.bf16.msra.mxu0 %v1138
    %1327 = vmatmul.bf16.gmra.mxu0 %v856
    %v1328 = vpop.f32.mrf.mxu0
    %v1329 = vadd.f32 %v1315, %v1328
    %v1330 = vpop.f32.mrf.mxu0
    %v1331 = vadd.f32 %v1317, %v1330
    %1332 = vdwg.mxu0
    %1333 = vmatpush.bf16.msra.mxu0 %v1168
    %1334 = vmatpush.bf16.msra.mxu0 %v1166
    %1335 = vmatpush.bf16.msra.mxu0 %v1164
    %1336 = vmatpush.bf16.msra.mxu0 %v1162
    %1337 = vmatpush.bf16.msra.mxu0 %v1160
    %1338 = vmatpush.bf16.msra.mxu0 %v1158
    %1339 = vmatpush.bf16.msra.mxu0 %v1156
    %1340 = vmatpush.bf16.msra.mxu0 %v1154
    %1341 = vmatmul.bf16.gmra.mxu0 %v857
    %v1342 = vpop.f32.mrf.mxu0
    %v1343 = vadd.f32 %v1329, %v1342
    %v1344 = vpop.f32.mrf.mxu0
    %v1345 = vadd.f32 %v1331, %v1344
    %1346 = vdwg.mxu0
    %1347 = vmatpush.bf16.msra.mxu0 %v1184
    %1348 = vmatpush.bf16.msra.mxu0 %v1182
    %1349 = vmatpush.bf16.msra.mxu0 %v1180
    %1350 = vmatpush.bf16.msra.mxu0 %v1178
    %1351 = vmatpush.bf16.msra.mxu0 %v1176
    %1352 = vmatpush.bf16.msra.mxu0 %v1174
    %1353 = vmatpush.bf16.msra.mxu0 %v1172
    %1354 = vmatpush.bf16.msra.mxu0 %v1170
    %1355 = vmatmul.bf16.gmra.mxu0 %v858
    %v1356 = vpop.f32.mrf.mxu0
    %v1357 = vadd.f32 %v1343, %v1356
    %v1358 = vpop.f32.mrf.mxu0
    %v1359 = vadd.f32 %v1345, %v1358
    %1360 = vdwg.mxu0
    %v1361 = vmax.f32 %v1301, 0.0
    %v1362 = vmax.f32 %v1357, 0.0
    %v1363 = vmax.f32 %v1303, 0.0
    %v1364 = vmax.f32 %v1359, 0.0
    %v1365 = vpack.c.bf16 %v1363, %v1361
    %v1366 = vpack.c.bf16 %v1364, %v1362
    %v1367 = vld [vmem:[#allocation6] sm:$0xff]
    %v1368 = vld [vmem:[#allocation6 + $0x8] sm:$0xff]
    %v1369 = vld [vmem:[#allocation6 + $0x10] sm:$0xf]
    %v1370 = vld [vmem:[#allocation6 + $0x14] sm:$0xff]
    %v1371 = vld [vmem:[#allocation6 + $0x1c] sm:$0xff]
    %v1372 = vld [vmem:[#allocation6 + $0x24] sm:$0xf]
    %v1373 = vld [vmem:[#allocation6 + $0x28] sm:$0xff]
    %v1374 = vld [vmem:[#allocation6 + $0x30] sm:$0xff]
    %v1375 = vld [vmem:[#allocation6 + $0x38] sm:$0xf]
    %v1376 = vld [vmem:[#allocation6 + $0x3c] sm:$0xff]
    %v1377 = vld [vmem:[#allocation6 + $0x44] sm:$0xff]
    %v1378 = vld [vmem:[#allocation6 + $0x4c] sm:$0xf]
    %v1379 = vld [vmem:[#allocation6 + $0x50] sm:$0xff]
    %v1380 = vld [vmem:[#allocation6 + $0x58] sm:$0xff]
    %v1381 = vld [vmem:[#allocation6 + $0x60] sm:$0xf]
    %v1382 = vld [vmem:[#allocation6 + $0x64] sm:$0xff]
    %v1383 = vld [vmem:[#allocation6 + $0x6c] sm:$0xff]
    %v1384 = vld [vmem:[#allocation6 + $0x74] sm:$0xf]
    %v1385 = vld [vmem:[#allocation6 + $0x78] sm:$0xff]
    %v1386 = vld [vmem:[#allocation6 + $0x80] sm:$0xff]
    %v1387 = vld [vmem:[#allocation6 + $0x88] sm:$0xf]
    %v1388 = vld [vmem:[#allocation6 + $0x8c] sm:$0xff]
    %v1389 = vld [vmem:[#allocation6 + $0x94] sm:$0xff]
    %v1390 = vld [vmem:[#allocation6 + $0x9c] sm:$0xf]
    %v1391 = vld [vmem:[#allocation6 + $0xa0] sm:$0xff]
    %v1392 = vld [vmem:[#allocation6 + $0xa8] sm:$0xff]
    %v1393 = vld [vmem:[#allocation6 + $0xb0] sm:$0xf]
    %v1394 = vld [vmem:[#allocation6 + $0xb4] sm:$0xff]
    %v1395 = vld [vmem:[#allocation6 + $0xbc] sm:$0xff]
    %v1396 = vld [vmem:[#allocation6 + $0xc4] sm:$0xf]
    %v1397 = vld [vmem:[#allocation6 + $0xc8] sm:$0xff]
    %v1398 = vld [vmem:[#allocation6 + $0xd0] sm:$0xff]
    %v1399 = vld [vmem:[#allocation6 + $0xd8] sm:$0xf]
    %v1400 = vld [vmem:[#allocation6 + $0xdc] sm:$0xff]
    %v1401 = vld [vmem:[#allocation6 + $0xe4] sm:$0xff]
    %v1402 = vld [vmem:[#allocation6 + $0xec] sm:$0xf]
    %v1403 = vld [vmem:[#allocation6 + $0xf0] sm:$0xff]
    %v1404 = vld [vmem:[#allocation6 + $0xf8] sm:$0xff]
    %v1405 = vld [vmem:[#allocation6 + $0x100] sm:$0xf]
    %v1406 = vld [vmem:[#allocation6 + $0x104] sm:$0xff]
    %v1407 = vld [vmem:[#allocation6 + $0x10c] sm:$0xff]
    %v1408 = vld [vmem:[#allocation6 + $0x114] sm:$0xf]
    %v1409 = vld [vmem:[#allocation6 + $0x118] sm:$0xff]
    %v1410 = vld [vmem:[#allocation6 + $0x120] sm:$0xff]
    %v1411 = vld [vmem:[#allocation6 + $0x128] sm:$0xf]
    %v1412 = vld [vmem:[#allocation6 + $0x12c] sm:$0xff]
    %v1413 = vld [vmem:[#allocation6 + $0x134] sm:$0xff]
    %v1414 = vld [vmem:[#allocation6 + $0x13c] sm:$0xf]
    %v1415 = vld [vmem:[#allocation6 + $0x140] sm:$0xff]
    %v1416 = vld [vmem:[#allocation6 + $0x148] sm:$0xff]
    %v1417 = vld [vmem:[#allocation6 + $0x150] sm:$0xf]
    %v1418 = vld [vmem:[#allocation6 + $0x154] sm:$0xff]
    %v1419 = vld [vmem:[#allocation6 + $0x15c] sm:$0xff]
    %v1420 = vld [vmem:[#allocation6 + $0x164] sm:$0xf]
    %v1421 = vld [vmem:[#allocation6 + $0x168] sm:$0xff]
    %v1422 = vld [vmem:[#allocation6 + $0x170] sm:$0xff]
    %v1423 = vld [vmem:[#allocation6 + $0x178] sm:$0xf]
    %v1424 = vld [vmem:[#allocation6 + $0x17c] sm:$0xff]
    %v1425 = vld [vmem:[#allocation6 + $0x184] sm:$0xff]
    %v1426 = vld [vmem:[#allocation6 + $0x18c] sm:$0xf]
    %v1427 = vld [vmem:[#allocation6 + $0x190] sm:$0xff]
    %v1428 = vld [vmem:[#allocation6 + $0x198] sm:$0xff]
    %v1429 = vld [vmem:[#allocation6 + $0x1a0] sm:$0xf]
    %v1430 = vld [vmem:[#allocation6 + $0x1a4] sm:$0xff]
    %v1431 = vld [vmem:[#allocation6 + $0x1ac] sm:$0xff]
    %v1432 = vld [vmem:[#allocation6 + $0x1b4] sm:$0xf]
    %v1433 = vld [vmem:[#allocation6 + $0x1b8] sm:$0xff]
    %v1434 = vld [vmem:[#allocation6 + $0x1c0] sm:$0xff]
    %v1435 = vld [vmem:[#allocation6 + $0x1c8] sm:$0xf]
    %v1436 = vld [vmem:[#allocation6 + $0x1cc] sm:$0xff]
    %v1437 = vld [vmem:[#allocation6 + $0x1d4] sm:$0xff]
    %v1438 = vld [vmem:[#allocation6 + $0x1dc] sm:$0xf]
    %v1439 = vld [vmem:[#allocation6 + $0x1e0] sm:$0xff]
    %v1440 = vld [vmem:[#allocation6 + $0x1e8] sm:$0xff]
    %v1441 = vld [vmem:[#allocation6 + $0x1f0] sm:$0xf]
    %v1442 = vld [vmem:[#allocation6 + $0x1f4] sm:$0xff]
    %v1443 = vld [vmem:[#allocation6 + $0x1fc] sm:$0xff]
    %v1444 = vld [vmem:[#allocation6 + $0x204] sm:$0xf]
    %v1445 = vld [vmem:[#allocation6 + $0x208] sm:$0xff]
    %v1446 = vld [vmem:[#allocation6 + $0x210] sm:$0xff]
    %v1447 = vld [vmem:[#allocation6 + $0x218] sm:$0xf]
    %v1448 = vld [vmem:[#allocation6 + $0x21c] sm:$0xff]
    %v1449 = vld [vmem:[#allocation6 + $0x224] sm:$0xff]
    %v1450 = vld [vmem:[#allocation6 + $0x22c] sm:$0xf]
    %v1451 = vld [vmem:[#allocation6 + $0x230] sm:$0xff]
    %v1452 = vld [vmem:[#allocation6 + $0x238] sm:$0xff]
    %v1453 = vld [vmem:[#allocation6 + $0x240] sm:$0xf]
    %v1454 = vld [vmem:[#allocation6 + $0x244] sm:$0xff]
    %v1455 = vld [vmem:[#allocation6 + $0x24c] sm:$0xff]
    %v1456 = vld [vmem:[#allocation6 + $0x254] sm:$0xf]
    %v1457 = vld [vmem:[#allocation6 + $0x258] sm:$0xff]
    %v1458 = vld [vmem:[#allocation6 + $0x260] sm:$0xff]
    %v1459 = vld [vmem:[#allocation6 + $0x268] sm:$0xf]
    %v1460 = vld [vmem:[#allocation6 + $0x26c] sm:$0xff]
    %v1461 = vld [vmem:[#allocation6 + $0x274] sm:$0xff]
    %v1462 = vld [vmem:[#allocation6 + $0x27c] sm:$0xf]
    %v1463 = vld [vmem:[%s6] sm:$0x1f]
    %v1465 = vperm.slane %v1463, 0
    %v1466 = vperm.slane %v1463, 1
    %v1467 = vperm.slane %v1463, 2
    %v1468 = vperm.slane %v1463, 3
    %v1469 = vperm.slane %v1463, 4
    %v1571 = vunpack.c.l.b16 %v1367
    %v1572 = vunpack.c.h.b16 %v1367
    %v1573 = vunpack.c.l.b16 %v1368
    %v1574 = vunpack.c.h.b16 %v1368
    %v1575 = vunpack.c.l.b16 %v1369
    %v1576 = vunpack.c.l.b16 %v1370
    %v1577 = vunpack.c.h.b16 %v1370
    %v1578 = vunpack.c.l.b16 %v1371
    %v1579 = vunpack.c.h.b16 %v1371
    %v1580 = vunpack.c.l.b16 %v1372
    %v1581 = vunpack.c.l.b16 %v1373
    %v1582 = vunpack.c.h.b16 %v1373
    %v1583 = vunpack.c.l.b16 %v1374
    %v1584 = vunpack.c.h.b16 %v1374
    %v1585 = vunpack.c.l.b16 %v1375
    %v1586 = vunpack.c.l.b16 %v1376
    %v1587 = vunpack.c.h.b16 %v1376
    %v1588 = vunpack.c.l.b16 %v1377
    %v1589 = vunpack.c.h.b16 %v1377
    %v1590 = vunpack.c.l.b16 %v1378
    %v1591 = vunpack.c.l.b16 %v1379
    %v1592 = vunpack.c.h.b16 %v1379
    %v1593 = vunpack.c.l.b16 %v1380
    %v1594 = vunpack.c.h.b16 %v1380
    %v1595 = vunpack.c.l.b16 %v1381
    %v1596 = vunpack.c.l.b16 %v1382
    %v1597 = vunpack.c.h.b16 %v1382
    %v1598 = vunpack.c.l.b16 %v1383
    %v1599 = vunpack.c.h.b16 %v1383
    %v1600 = vunpack.c.l.b16 %v1384
    %v1601 = vunpack.c.l.b16 %v1385
    %v1602 = vunpack.c.h.b16 %v1385
    %v1603 = vunpack.c.l.b16 %v1386
    %v1604 = vunpack.c.h.b16 %v1386
    %v1605 = vunpack.c.l.b16 %v1387
    %v1606 = vunpack.c.l.b16 %v1388
    %v1607 = vunpack.c.h.b16 %v1388
    %v1608 = vunpack.c.l.b16 %v1389
    %v1609 = vunpack.c.h.b16 %v1389
    %v1610 = vunpack.c.l.b16 %v1390
    %v1611 = vunpack.c.l.b16 %v1391
    %v1612 = vunpack.c.h.b16 %v1391
    %v1613 = vunpack.c.l.b16 %v1392
    %v1614 = vunpack.c.h.b16 %v1392
    %v1615 = vunpack.c.l.b16 %v1393
    %v1616 = vunpack.c.l.b16 %v1394
    %v1617 = vunpack.c.h.b16 %v1394
    %v1618 = vunpack.c.l.b16 %v1395
    %v1619 = vunpack.c.h.b16 %v1395
    %v1620 = vunpack.c.l.b16 %v1396
    %v1621 = vunpack.c.l.b16 %v1397
    %v1622 = vunpack.c.h.b16 %v1397
    %v1623 = vunpack.c.l.b16 %v1398
    %v1624 = vunpack.c.h.b16 %v1398
    %v1625 = vunpack.c.l.b16 %v1399
    %v1626 = vunpack.c.l.b16 %v1400
    %v1627 = vunpack.c.h.b16 %v1400
    %v1628 = vunpack.c.l.b16 %v1401
    %v1629 = vunpack.c.h.b16 %v1401
    %v1630 = vunpack.c.l.b16 %v1402
    %v1631 = vunpack.c.l.b16 %v1403
    %v1632 = vunpack.c.h.b16 %v1403
    %v1633 = vunpack.c.l.b16 %v1404
    %v1634 = vunpack.c.h.b16 %v1404
    %v1635 = vunpack.c.l.b16 %v1405
    %v1636 = vunpack.c.l.b16 %v1406
    %v1637 = vunpack.c.h.b16 %v1406
    %v1638 = vunpack.c.l.b16 %v1407
    %v1639 = vunpack.c.h.b16 %v1407
    %v1640 = vunpack.c.l.b16 %v1408
    %v1641 = vunpack.c.l.b16 %v1409
    %v1642 = vunpack.c.h.b16 %v1409
    %v1643 = vunpack.c.l.b16 %v1410
    %v1644 = vunpack.c.h.b16 %v1410
    %v1645 = vunpack.c.l.b16 %v1411
    %v1646 = vunpack.c.l.b16 %v1412
    %v1647 = vunpack.c.h.b16 %v1412
    %v1648 = vunpack.c.l.b16 %v1413
    %v1649 = vunpack.c.h.b16 %v1413
    %v1650 = vunpack.c.l.b16 %v1414
    %v1651 = vunpack.c.l.b16 %v1415
    %v1652 = vunpack.c.h.b16 %v1415
    %v1653 = vunpack.c.l.b16 %v1416
    %v1654 = vunpack.c.h.b16 %v1416
    %v1655 = vunpack.c.l.b16 %v1417
    %v1656 = vunpack.c.l.b16 %v1418
    %v1657 = vunpack.c.h.b16 %v1418
    %v1658 = vunpack.c.l.b16 %v1419
    %v1659 = vunpack.c.h.b16 %v1419
    %v1660 = vunpack.c.l.b16 %v1420
    %v1661 = vunpack.c.l.b16 %v1421
    %v1662 = vunpack.c.h.b16 %v1421
    %v1663 = vunpack.c.l.b16 %v1422
    %v1664 = vunpack.c.h.b16 %v1422
    %v1665 = vunpack.c.l.b16 %v1423
    %v1666 = vunpack.c.l.b16 %v1424
    %v1667 = vunpack.c.h.b16 %v1424
    %v1668 = vunpack.c.l.b16 %v1425
    %v1669 = vunpack.c.h.b16 %v1425
    %v1670 = vunpack.c.l.b16 %v1426
    %v1671 = vunpack.c.l.b16 %v1427
    %v1672 = vunpack.c.h.b16 %v1427
    %v1673 = vunpack.c.l.b16 %v1428
    %v1674 = vunpack.c.h.b16 %v1428
    %v1675 = vunpack.c.l.b16 %v1429
    %v1676 = vunpack.c.l.b16 %v1430
    %v1677 = vunpack.c.h.b16 %v1430
    %v1678 = vunpack.c.l.b16 %v1431
    %v1679 = vunpack.c.h.b16 %v1431
    %v1680 = vunpack.c.l.b16 %v1432
    %v1681 = vunpack.c.l.b16 %v1433
    %v1682 = vunpack.c.h.b16 %v1433
    %v1683 = vunpack.c.l.b16 %v1434
    %v1684 = vunpack.c.h.b16 %v1434
    %v1685 = vunpack.c.l.b16 %v1435
    %v1686 = vunpack.c.l.b16 %v1436
    %v1687 = vunpack.c.h.b16 %v1436
    %v1688 = vunpack.c.l.b16 %v1437
    %v1689 = vunpack.c.h.b16 %v1437
    %v1690 = vunpack.c.l.b16 %v1438
    %v1691 = vunpack.c.l.b16 %v1439
    %v1692 = vunpack.c.h.b16 %v1439
    %v1693 = vunpack.c.l.b16 %v1440
    %v1694 = vunpack.c.h.b16 %v1440
    %v1695 = vunpack.c.l.b16 %v1441
    %v1696 = vunpack.c.l.b16 %v1442
    %v1697 = vunpack.c.h.b16 %v1442
    %v1698 = vunpack.c.l.b16 %v1443
    %v1699 = vunpack.c.h.b16 %v1443
    %v1700 = vunpack.c.l.b16 %v1444
    %v1701 = vunpack.c.l.b16 %v1445
    %v1702 = vunpack.c.h.b16 %v1445
    %v1703 = vunpack.c.l.b16 %v1446
    %v1704 = vunpack.c.h.b16 %v1446
    %v1705 = vunpack.c.l.b16 %v1447
    %v1706 = vunpack.c.l.b16 %v1448
    %v1707 = vunpack.c.h.b16 %v1448
    %v1708 = vunpack.c.l.b16 %v1449
    %v1709 = vunpack.c.h.b16 %v1449
    %v1710 = vunpack.c.l.b16 %v1450
    %v1711 = vunpack.c.l.b16 %v1451
    %v1712 = vunpack.c.h.b16 %v1451
    %v1713 = vunpack.c.l.b16 %v1452
    %v1714 = vunpack.c.h.b16 %v1452
    %v1715 = vunpack.c.l.b16 %v1453
    %v1716 = vunpack.c.l.b16 %v1454
    %v1717 = vunpack.c.h.b16 %v1454
    %v1718 = vunpack.c.l.b16 %v1455
    %v1719 = vunpack.c.h.b16 %v1455
    %v1720 = vunpack.c.l.b16 %v1456
    %v1721 = vunpack.c.l.b16 %v1457
    %v1722 = vunpack.c.h.b16 %v1457
    %v1723 = vunpack.c.l.b16 %v1458
    %v1724 = vunpack.c.h.b16 %v1458
    %v1725 = vunpack.c.l.b16 %v1459
    %v1726 = vunpack.c.l.b16 %v1460
    %v1727 = vunpack.c.h.b16 %v1460
    %v1728 = vunpack.c.l.b16 %v1461
    %v1729 = vunpack.c.h.b16 %v1461
    %v1730 = vunpack.c.l.b16 %v1462
    %v1731 = vpack.c.b16 %v1576, %v1571
    %v1732 = vpack.c.b16 %v1577, %v1572
    %v1733 = vpack.c.b16 %v1578, %v1573
    %v1734 = vpack.c.b16 %v1579, %v1574
    %v1735 = vpack.c.b16 %v1580, %v1575
    %v1736 = vpack.c.b16 %v1586, %v1581
    %v1737 = vpack.c.b16 %v1587, %v1582
    %v1738 = vpack.c.b16 %v1588, %v1583
    %v1739 = vpack.c.b16 %v1589, %v1584
    %v1740 = vpack.c.b16 %v1590, %v1585
    %v1741 = vpack.c.b16 %v1596, %v1591
    %v1742 = vpack.c.b16 %v1597, %v1592
    %v1743 = vpack.c.b16 %v1598, %v1593
    %v1744 = vpack.c.b16 %v1599, %v1594
    %v1745 = vpack.c.b16 %v1600, %v1595
    %v1746 = vpack.c.b16 %v1606, %v1601
    %v1747 = vpack.c.b16 %v1607, %v1602
    %v1748 = vpack.c.b16 %v1608, %v1603
    %v1749 = vpack.c.b16 %v1609, %v1604
    %v1750 = vpack.c.b16 %v1610, %v1605
    %v1751 = vpack.c.b16 %v1616, %v1611
    %v1752 = vpack.c.b16 %v1617, %v1612
    %v1753 = vpack.c.b16 %v1618, %v1613
    %v1754 = vpack.c.b16 %v1619, %v1614
    %v1755 = vpack.c.b16 %v1620, %v1615
    %v1756 = vpack.c.b16 %v1626, %v1621
    %v1757 = vpack.c.b16 %v1627, %v1622
    %v1758 = vpack.c.b16 %v1628, %v1623
    %v1759 = vpack.c.b16 %v1629, %v1624
    %v1760 = vpack.c.b16 %v1630, %v1625
    %v1761 = vpack.c.b16 %v1636, %v1631
    %v1762 = vpack.c.b16 %v1637, %v1632
    %v1763 = vpack.c.b16 %v1638, %v1633
    %v1764 = vpack.c.b16 %v1639, %v1634
    %v1765 = vpack.c.b16 %v1640, %v1635
    %v1766 = vpack.c.b16 %v1646, %v1641
    %v1767 = vpack.c.b16 %v1647, %v1642
    %v1768 = vpack.c.b16 %v1648, %v1643
    %v1769 = vpack.c.b16 %v1649, %v1644
    %v1770 = vpack.c.b16 %v1650, %v1645
    %v1771 = vpack.c.b16 %v1656, %v1651
    %v1772 = vpack.c.b16 %v1657, %v1652
    %v1773 = vpack.c.b16 %v1658, %v1653
    %v1774 = vpack.c.b16 %v1659, %v1654
    %v1775 = vpack.c.b16 %v1660, %v1655
    %v1776 = vpack.c.b16 %v1666, %v1661
    %v1777 = vpack.c.b16 %v1667, %v1662
    %v1778 = vpack.c.b16 %v1668, %v1663
    %v1779 = vpack.c.b16 %v1669, %v1664
    %v1780 = vpack.c.b16 %v1670, %v1665
    %v1781 = vpack.c.b16 %v1676, %v1671
    %v1782 = vpack.c.b16 %v1677, %v1672
    %v1783 = vpack.c.b16 %v1678, %v1673
    %v1784 = vpack.c.b16 %v1679, %v1674
    %v1785 = vpack.c.b16 %v1680, %v1675
    %v1786 = vpack.c.b16 %v1686, %v1681
    %v1787 = vpack.c.b16 %v1687, %v1682
    %v1788 = vpack.c.b16 %v1688, %v1683
    %v1789 = vpack.c.b16 %v1689, %v1684
    %v1790 = vpack.c.b16 %v1690, %v1685
    %v1791 = vpack.c.b16 %v1696, %v1691
    %v1792 = vpack.c.b16 %v1697, %v1692
    %v1793 = vpack.c.b16 %v1698, %v1693
    %v1794 = vpack.c.b16 %v1699, %v1694
    %v1795 = vpack.c.b16 %v1700, %v1695
    %v1796 = vpack.c.b16 %v1706, %v1701
    %v1797 = vpack.c.b16 %v1707, %v1702
    %v1798 = vpack.c.b16 %v1708, %v1703
    %v1799 = vpack.c.b16 %v1709, %v1704
    %v1800 = vpack.c.b16 %v1710, %v1705
    %v1801 = vpack.c.b16 %v1716, %v1711
    %v1802 = vpack.c.b16 %v1717, %v1712
    %v1803 = vpack.c.b16 %v1718, %v1713
    %v1804 = vpack.c.b16 %v1719, %v1714
    %v1805 = vpack.c.b16 %v1720, %v1715
    %v1806 = vpack.c.b16 %v1726, %v1721
    %v1807 = vpack.c.b16 %v1727, %v1722
    %v1808 = vpack.c.b16 %v1728, %v1723
    %v1809 = vpack.c.b16 %v1729, %v1724
    %v1810 = vpack.c.b16 %v1730, %v1725
    %1891 = vmatpush.bf16.msra.mxu0 %v1766
    %1892 = vmatpush.bf16.msra.mxu0 %v1761
    %1893 = vmatpush.bf16.msra.mxu0 %v1756
    %1894 = vmatpush.bf16.msra.mxu0 %v1751
    %1895 = vmatpush.bf16.msra.mxu0 %v1746
    %1896 = vmatpush.bf16.msra.mxu0 %v1741
    %1897 = vmatpush.bf16.msra.mxu0 %v1736
    %1898 = vmatpush.bf16.msra.mxu0 %v1731
    %1899 = vmatmul.bf16.gmra.mxu0 %v1365
    %v1900 = vpop.f32.mrf.mxu0
    %v1901 = vadd.f32 %v1465, %v1900
    %v1902 = vpop.f32.mrf.mxu0
    %v1903 = vadd.f32 %v1465, %v1902
    %1904 = vdwg.mxu0
    %1905 = vmatpush.bf16.msra.mxu0 %v1806
    %1906 = vmatpush.bf16.msra.mxu0 %v1801
    %1907 = vmatpush.bf16.msra.mxu0 %v1796
    %1908 = vmatpush.bf16.msra.mxu0 %v1791
    %1909 = vmatpush.bf16.msra.mxu0 %v1786
    %1910 = vmatpush.bf16.msra.mxu0 %v1781
    %1911 = vmatpush.bf16.msra.mxu0 %v1776
    %1912 = vmatpush.bf16.msra.mxu0 %v1771
    %1913 = vmatmul.bf16.gmra.mxu0 %v1366
    %v1914 = vpop.f32.mrf.mxu0
    %v1915 = vadd.f32 %v1901, %v1914
    %v1916 = vpop.f32.mrf.mxu0
    %v1917 = vadd.f32 %v1903, %v1916
    %1918 = vdwg.mxu0
    %1919 = vmatpush.bf16.msra.mxu0 %v1767
    %1920 = vmatpush.bf16.msra.mxu0 %v1762
    %1921 = vmatpush.bf16.msra.mxu0 %v1757
    %1922 = vmatpush.bf16.msra.mxu0 %v1752
    %1923 = vmatpush.bf16.msra.mxu0 %v1747
    %1924 = vmatpush.bf16.msra.mxu0 %v1742
    %1925 = vmatpush.bf16.msra.mxu0 %v1737
    %1926 = vmatpush.bf16.msra.mxu0 %v1732
    %1927 = vmatmul.bf16.gmra.mxu0 %v1365
    %v1928 = vpop.f32.mrf.mxu0
    %v1929 = vadd.f32 %v1466, %v1928
    %v1930 = vpop.f32.mrf.mxu0
    %v1931 = vadd.f32 %v1466, %v1930
    %1932 = vdwg.mxu0
    %1933 = vmatpush.bf16.msra.mxu0 %v1807
    %1934 = vmatpush.bf16.msra.mxu0 %v1802
    %1935 = vmatpush.bf16.msra.mxu0 %v1797
    %1936 = vmatpush.bf16.msra.mxu0 %v1792
    %1937 = vmatpush.bf16.msra.mxu0 %v1787
    %1938 = vmatpush.bf16.msra.mxu0 %v1782
    %1939 = vmatpush.bf16.msra.mxu0 %v1777
    %1940 = vmatpush.bf16.msra.mxu0 %v1772
    %1941 = vmatmul.bf16.gmra.mxu0 %v1366
    %v1942 = vpop.f32.mrf.mxu0
    %v1943 = vadd.f32 %v1929, %v1942
    %v1944 = vpop.f32.mrf.mxu0
    %v1945 = vadd.f32 %v1931, %v1944
    %1946 = vdwg.mxu0
    %1947 = vmatpush.bf16.msra.mxu0 %v1768
    %1948 = vmatpush.bf16.msra.mxu0 %v1763
    %1949 = vmatpush.bf16.msra.mxu0 %v1758
    %1950 = vmatpush.bf16.msra.mxu0 %v1753
    %1951 = vmatpush.bf16.msra.mxu0 %v1748
    %1952 = vmatpush.bf16.msra.mxu0 %v1743
    %1953 = vmatpush.bf16.msra.mxu0 %v1738
    %1954 = vmatpush.bf16.msra.mxu0 %v1733
    %1955 = vmatmul.bf16.gmra.mxu0 %v1365
    %v1956 = vpop.f32.mrf.mxu0
    %v1957 = vadd.f32 %v1467, %v1956
    %v1958 = vpop.f32.mrf.mxu0
    %v1959 = vadd.f32 %v1467, %v1958
    %1960 = vdwg.mxu0
    %1961 = vmatpush.bf16.msra.mxu0 %v1808
    %1962 = vmatpush.bf16.msra.mxu0 %v1803
    %1963 = vmatpush.bf16.msra.mxu0 %v1798
    %1964 = vmatpush.bf16.msra.mxu0 %v1793
    %1965 = vmatpush.bf16.msra.mxu0 %v1788
    %1966 = vmatpush.bf16.msra.mxu0 %v1783
    %1967 = vmatpush.bf16.msra.mxu0 %v1778
    %1968 = vmatpush.bf16.msra.mxu0 %v1773
    %1969 = vmatmul.bf16.gmra.mxu0 %v1366
    %v1970 = vpop.f32.mrf.mxu0
    %v1971 = vadd.f32 %v1957, %v1970
    %v1972 = vpop.f32.mrf.mxu0
    %v1973 = vadd.f32 %v1959, %v1972
    %1974 = vdwg.mxu0
    %1975 = vmatpush.bf16.msra.mxu0 %v1769
    %1976 = vmatpush.bf16.msra.mxu0 %v1764
    %1977 = vmatpush.bf16.msra.mxu0 %v1759
    %1978 = vmatpush.bf16.msra.mxu0 %v1754
    %1979 = vmatpush.bf16.msra.mxu0 %v1749
    %1980 = vmatpush.bf16.msra.mxu0 %v1744
    %1981 = vmatpush.bf16.msra.mxu0 %v1739
    %1982 = vmatpush.bf16.msra.mxu0 %v1734
    %1983 = vmatmul.bf16.gmra.mxu0 %v1365
    %v1984 = vpop.f32.mrf.mxu0
    %v1985 = vadd.f32 %v1468, %v1984
    %v1986 = vpop.f32.mrf.mxu0
    %v1987 = vadd.f32 %v1468, %v1986
    %1988 = vdwg.mxu0
    %1989 = vmatpush.bf16.msra.mxu0 %v1809
    %1990 = vmatpush.bf16.msra.mxu0 %v1804
    %1991 = vmatpush.bf16.msra.mxu0 %v1799
    %1992 = vmatpush.bf16.msra.mxu0 %v1794
    %1993 = vmatpush.bf16.msra.mxu0 %v1789
    %1994 = vmatpush.bf16.msra.mxu0 %v1784
    %1995 = vmatpush.bf16.msra.mxu0 %v1779
    %1996 = vmatpush.bf16.msra.mxu0 %v1774
    %1997 = vmatmul.bf16.gmra.mxu0 %v1366
    %v1998 = vpop.f32.mrf.mxu0
    %v1999 = vadd.f32 %v1985, %v1998
    %v2000 = vpop.f32.mrf.mxu0
    %v2001 = vadd.f32 %v1987, %v2000
    %2002 = vdwg.mxu0
    %2003 = vmatpush.bf16.msra.mxu0 %v1770
    %2004 = vmatpush.bf16.msra.mxu0 %v1765
    %2005 = vmatpush.bf16.msra.mxu0 %v1760
    %2006 = vmatpush.bf16.msra.mxu0 %v1755
    %2007 = vmatpush.bf16.msra.mxu0 %v1750
    %2008 = vmatpush.bf16.msra.mxu0 %v1745
    %2009 = vmatpush.bf16.msra.mxu0 %v1740
    %2010 = vmatpush.bf16.msra.mxu0 %v1735
    %2011 = vmatmul.bf16.gmra.mxu0 %v1365
    %v2012 = vpop.f32.mrf.mxu0
    %v2013 = vadd.f32 %v1469, %v2012
    %v2014 = vpop.f32.mrf.mxu0
    %v2015 = vadd.f32 %v1469, %v2014
    %2016 = vdwg.mxu0
    %2017 = vmatpush.bf16.msra.mxu0 %v1810
    %2018 = vmatpush.bf16.msra.mxu0 %v1805
    %2019 = vmatpush.bf16.msra.mxu0 %v1800
    %2020 = vmatpush.bf16.msra.mxu0 %v1795
    %2021 = vmatpush.bf16.msra.mxu0 %v1790
    %2022 = vmatpush.bf16.msra.mxu0 %v1785
    %2023 = vmatpush.bf16.msra.mxu0 %v1780
    %2024 = vmatpush.bf16.msra.mxu0 %v1775
    %2025 = vmatmul.bf16.gmra.mxu0 %v1366
    %v2026 = vpop.f32.mrf.mxu0
    %v2027 = vadd.f32 %v2013, %v2026
    %v2028 = vpop.f32.mrf.mxu0
    %v2029 = vadd.f32 %v2015, %v2028
    %2030 = vdwg.mxu0
    %v2031 = vmax.f32 %v1915, %v1971
    %v2032 = vmax.f32 %v1943, %v1999
    %v2033 = vmax.f32 %v2031, %v2032
    %2034 = vmax.xlane.f32.xlu0 %v2033
    %v2035 = vpop.xlane.xlu0 %2034
    %v2036 = vmax.f32 %v1917, %v1973
    %v2037 = vmax.f32 %v1945, %v2001
    %v2038 = vmax.f32 %v2036, %v2037
    %2039 = vmax.xlane.f32.xlu0 %v2038
    %v2040 = vpop.xlane.xlu0 %2039
    %v2041 = vsub.f32 %v1915, %v2035
    %v2042 = vsub.f32 %v1943, %v2035
    %v2043 = vsub.f32 %v1971, %v2035
    %v2044 = vsub.f32 %v1999, %v2035
    %v2045 = vsub.f32 %v1917, %v2040
    %v2046 = vsub.f32 %v1945, %v2040
    %v2047 = vsub.f32 %v1973, %v2040
    %v2048 = vsub.f32 %v2001, %v2040
    %v2049 = vmul.f32 %v2041, 1.442695
    %v2050 = vpow.pop %v2049
    %v2051 = vmul.f32 %v2042, 1.442695
    %v2052 = vpow.pop %v2051
    %v2053 = vmul.f32 %v2043, 1.442695
    %v2054 = vpow.pop %v2053
    %v2055 = vmul.f32 %v2044, 1.442695
    %v2056 = vpow.pop %v2055
    %v2057 = vmul.f32 %v2045, 1.442695
    %v2058 = vpow.pop %v2057
    %v2059 = vmul.f32 %v2046, 1.442695
    %v2060 = vpow.pop %v2059
    %v2061 = vmul.f32 %v2047, 1.442695
    %v2062 = vpow.pop %v2061
    %v2063 = vmul.f32 %v2048, 1.442695
    %v2064 = vpow.pop %v2063
    %v2065 = vadd.f32 %v2050, %v2052
    %v2066 = vadd.f32 %v2065, %v2054
    %v2067 = vadd.f32 %v2066, %v2056
    %2068 = vadd.xlane.f32.xlu0 %v2067
    %v2069 = vpop.xlane.xlu0 %2068
    %v2070 = vadd.f32 %v2058, %v2060
    %v2071 = vadd.f32 %v2070, %v2062
    %v2072 = vadd.f32 %v2071, %v2064
    %2073 = vadd.xlane.f32.xlu0 %v2072
    %v2074 = vpop.xlane.xlu0 %2073
    %v2075 = vrcp.pop %v2069
    %v2076 = vrcp.pop %v2074
    %v2077 = vmul.f32 %v2069, %v2075
    %v2078 = vmul.f32 %v2074, %v2076
    %v2079 = vsub.f32 2.0, %v2077
    %v2080 = vsub.f32 2.0, %v2078
    %v2081 = vmul.f32 %v2075, %v2079
    %v2082 = vmul.f32 %v2076, %v2080
    %v2083 = vmul.f32 %v2050, %v2081
    %v2084 = vmul.f32 %v2052, %v2081
    %v2085 = vmul.f32 %v2054, %v2081
    %v2086 = vmul.f32 %v2056, %v2081
    %v2087 = vmul.f32 %v2058, %v2082
    %v2088 = vmul.f32 %v2060, %v2082
    %v2089 = vmul.f32 %v2062, %v2082
    %v2090 = vmul.f32 %v2064, %v2082
    %v2091 = vpack.c.bf16 %v2084, %v2083
    %v2092 = vpack.c.bf16 %v2086, %v2085
    %v2093 = vpack.c.bf16 %v2088, %v2087
    %v2094 = vpack.c.bf16 %v2090, %v2089
    %2095 = vst [vmem:[%s7] sm:$0xff] %v2091
    %2096 = vst [vmem:[%s7 + $0x8] sm:$0xff] %v2092
    %2097 = vst [vmem:[%s7 + $0x14] sm:$0xff] %v2093
    %2098 = vst [vmem:[%s7 + $0x1c] sm:$0xff] %v2094
    %v2099 = vtanh.pop %v2027
    %v2100 = vtanh.pop %v2029
    %v2101 = vpack.c.bf16 %v2099, %v2099
    %v2102 = vpack.c.bf16 %v2100, %v2100
    %2103 = vst [vmem:[%s7 + $0x10] sm:$0xf] %v2101
    %2104 = vst [vmem:[%s7 + $0x24] sm:$0xf] %v2102
    // Predicated region
    $region42: #{_giraffe_forward_tiled.1} parent=1 // pred_check
      _
    $region43: #{_giraffe_forward_tiled.1} parent=1 // pred_check_branch
      %2106 = sbr.rel (0) target = $region45
    $region44: #{_giraffe_forward_tiled.1} parent=1 // pred_region
      _
    $region45: #{_giraffe_forward_tiled.1} parent=1 // pred_fallthru
      _
    // Predicated region
    $region46: #{_giraffe_forward_tiled.1} parent=1 // pred_check
      _
    $region47: #{_giraffe_forward_tiled.1} parent=1 // pred_check_branch
      %2108 = sbr.rel (0) target = $region49
    $region48: #{_giraffe_forward_tiled.1} parent=1 // pred_region
      _
    $region49: #{_giraffe_forward_tiled.1} parent=1 // pred_fallthru
      _
    %2109 = vsyncpa [#allocation3], 1
    %2110 = vsyncpa [#allocation5], 1

</llo_original>
